<compile_context>
chip_gen: v7x
topology: tpu7x:2x2x1
jax: 0.10.0
libtpu: 0.0.40
codegen_flags: <defaults>
</compile_context>

<pallas_src>
import functools
import math

import jax
import jax.numpy as jnp
from jax.experimental import pallas as pl
from jax.experimental.pallas import tpu as pltpu


def _round_up(x, m):
    return -(-x // m) * m


def _make_gabor_filters(in_channels, n_sigmas, n_lambdas, n_gammas, n_thetas,
                        kernel_radius):
    """Deterministic Gabor bank, same math as GaborFilters.make_gabor_filters.

    Returns gb of shape (C, nS, nL, nG, nP, nT, K, K), float32.
    """
    C = in_channels
    K = 2 * kernel_radius + 1

    def rep(vals):
        v = jnp.asarray(vals, dtype=jnp.float32).reshape(1, -1)
        return jnp.tile(v, (C, 1))

    sigmas = rep(2.0 ** jnp.arange(n_sigmas) * 2.0)              # (C, nS)
    lambdas = rep(2.0 ** jnp.arange(n_lambdas) * 4.0)            # (C, nL)
    gammas = rep(jnp.ones((n_gammas,), jnp.float32) * 0.5)       # (C, nG)
    psis = rep(jnp.array([0.0, math.pi / 2.0], jnp.float32))     # (C, 2)
    thetas = jnp.linspace(0.0, 2.0 * math.pi, num=n_thetas,
                          endpoint=False).astype(jnp.float32)    # (nT,)
    idx = jnp.arange(K, dtype=jnp.float32) - (K - 1) / 2.0       # (K,)

    nS, nL, nG, nP, nT = (sigmas.shape[1], lambdas.shape[1], gammas.shape[1],
                          psis.shape[1], thetas.shape[0])

    sig = sigmas.reshape(C, nS, 1, 1, 1, 1, 1, 1)
    lam = lambdas.reshape(C, 1, nL, 1, 1, 1, 1, 1)
    gam = gammas.reshape(C, 1, 1, nG, 1, 1, 1, 1)
    psi = psis.reshape(C, 1, 1, 1, nP, 1, 1, 1)
    th = thetas.reshape(1, 1, 1, 1, 1, nT, 1, 1)
    y = idx.reshape(1, 1, 1, 1, 1, 1, K, 1)
    x = idx.reshape(1, 1, 1, 1, 1, 1, 1, K)

    sigma_x = sig
    sigma_y = sig / gam
    sin_t = jnp.sin(th)
    cos_t = jnp.cos(th)
    y_theta = -x * sin_t + y * cos_t
    x_theta = x * cos_t + y * sin_t

    gaussian = jnp.exp(-0.5 * (x_theta ** 2 / sigma_x ** 2 +
                               y_theta ** 2 / sigma_y ** 2))
    wave = jnp.cos(2.0 * math.pi * x_theta / lam + psi)
    return gaussian * wave                    # (C, nS, nL, nG, nP, nT, K, K)


def _vmem_capacity_bytes():
    """Best-effort physical VMEM capacity of the current TPU generation."""
    try:
        info = pltpu.get_tpu_info()
        cap = getattr(info, "vmem_capacity_bytes", None)
        if cap:
            return int(cap)
    except Exception:
        pass
    return 64 * 1024 * 1024    # conservative default (v7x per-core VMEM)


def _gabor_conv_kernel(w_ref, p_ref, o_ref, *, n_thetas, fb):
    # w_ref: (rowsP, KKp)  fused theta-major filter bank, one channel
    # p_ref: (KKp, TN)     im2col patch tile (batch folded into lanes)
    # o_ref: (fb, TN) f32  max-over-theta Gabor responses
    # Single fused MXU matmul with f32 accumulation (rows beyond n_thetas*fb
    # are zero padding and simply ignored below).
    s = jnp.dot(w_ref[...], p_ref[...], preferred_element_type=jnp.float32)
    # Rotation-invariant max over theta: VPU max of T sublane-aligned row
    # blocks (fb is padded to a multiple of 8 in __init__ -> aligned slices).
    acc = s[0:fb]
    for t in range(1, n_thetas):
        acc = jnp.maximum(acc, s[t * fb:(t + 1) * fb])
    o_ref[...] = acc


class GaborFiltersPallas:
    """JAX/Pallas re-implementation of the PyTorch GaborFilters module."""

    def __init__(self, in_channels, n_sigmas=3, n_lambdas=4, n_gammas=1,
                 n_thetas=7, kernel_radius=15, rotation_invariant=True,
                 compute_dtype=jnp.bfloat16):
        self.in_channels = in_channels
        self.n_thetas = n_thetas
        self.kernel_radius = kernel_radius
        self.kernel_size = 2 * kernel_radius + 1
        self.rotation_invariant = rotation_invariant
        # bf16 patches/bank (default) are the accuracy limiter vs the f32
        # PyTorch module; use compute_dtype=jnp.float32 for full precision.
        self.compute_dtype = compute_dtype

        # Deterministic parameters (identical to the module's __init__ values).
        self.gb = _make_gabor_filters(in_channels, n_sigmas, n_lambdas,
                                      n_gammas, n_thetas, kernel_radius)
        C = in_channels
        K = self.kernel_size
        KK = K * K
        # Contraction pad: multiple of 16 (even bf16 sublane packing of the
        # patch tensor) instead of 128 -- the extra 63 rows of a 1024 pad were
        # ~6% of the binding patch HBM stream, all zero-multiplies.
        self.kk_pad = _round_up(KK, 16)

        nS, nL, nG, nP, nT = self.gb.shape[1:6]
        F = nS * nL * nG * nP * nT
        if rotation_invariant:
            # theta outermost; Fb = (sigma, lambda, gamma, psi) innermost,
            # matching the PyTorch res.view(..., F//nT, nT, ...).max(dim=3).
            bank = jnp.transpose(self.gb, (0, 5, 1, 2, 3, 4, 6, 7))
            bank = bank.reshape(C, nT, F // nT, KK)
        else:
            # no max: fold everything (theta innermost) into Fb, T == 1
            bank = self.gb.reshape(C, 1, F, KK)
        self.T = bank.shape[1]
        self.Fb = bank.shape[2]
        # Invariant: theta-max row blocks must start on f32 sublane-tile
        # boundaries -> pad Fb to a multiple of 8 (24 already is).
        self.Fb_pad = _round_up(self.Fb, 8)
        bank = jnp.pad(bank, ((0, 0), (0, 0),
                              (0, self.Fb_pad - self.Fb),
                              (0, self.kk_pad - KK)))
        bank = bank.reshape(C, self.T * self.Fb_pad, self.kk_pad)
        # Pad the LHS row count to a multiple of 16 (168 -> 176) so the bf16
        # bank packs evenly into (16,128) VMEM tiles (no ragged last tile).
        self.rows_pad = _round_up(self.T * self.Fb_pad, 16)
        bank = jnp.pad(bank, ((0, 0),
                              (0, self.rows_pad - self.T * self.Fb_pad),
                              (0, 0)))
        self.bank = bank.astype(self.compute_dtype)   # (C, rowsP, KKp)
        self._n_channels_post_conv = C * F

    def __call__(self, x):
        B, C, H, W = x.shape
        assert C == self.in_channels
        R, K = self.kernel_radius, self.kernel_size
        KK = K * K
        KKp = self.kk_pad
        T, Fb, Fbp = self.T, self.Fb, self.Fb_pad
        rows_p = self.rows_pad
        HW = H * W
        HWp = _round_up(HW, 128)

        # --- glue (plain JAX): quantize + go channel-major FIRST, then im2col
        # directly into the kernel layout (C, KKp, B*HWp).  The 961x-inflated
        # tensor is written exactly once, in bf16, in its final layout (v2
        # built it in f32 and then transposed the inflated tensor in HBM).
        # TODO(synk): build this tile in VMEM inside the kernel instead (see
        # module docstring) -- the kernel is HBM-bound on this stream.
        xq = jnp.transpose(x, (1, 0, 2, 3)).astype(self.compute_dtype)  # (C,B,H,W)
        xp = jnp.pad(xq, ((0, 0), (0, 0), (R, R), (R, R)))              # (C,B,Hp,Wp)
        rows = jnp.stack([xp[:, :, dy:dy + H, :] for dy in range(K)],
                         axis=1)                                        # (C,K,B,H,Wp)
        patches = jnp.stack([rows[..., dx:dx + W] for dx in range(K)],
                            axis=2)                                     # (C,K,K,B,H,W)
        patches = patches.reshape(C, KK, B, HW)
        patches = jnp.pad(patches,
                          ((0, 0), (0, KKp - KK), (0, 0), (0, HWp - HW)))
        patches = patches.reshape(C, KKp, B * HWp)                      # (C,KKp,N)

        # --- generation-aware N (lane) tiling + VMEM budget ------------------
        vmem_cap = _vmem_capacity_bytes()
        big_vmem = vmem_cap >= 96 * 1024 * 1024      # v5e / v6e: 128 MiB VMEM
        tn_target = 8192 if big_vmem else 4096       # v7x (64 MiB): cap TN
        vmem_limit = min((vmem_cap * 3) // 4, 112 * 1024 * 1024)  # >=25% headroom

        n_total = B * HWp                            # multiple of 128
        tn = min(tn_target, n_total)
        n_tiles = -(-n_total // tn)
        n_pad = n_tiles * tn
        if n_pad > n_total:
            patches = jnp.pad(patches, ((0, 0), (0, 0), (0, n_pad - n_total)))

        bank = self.bank                             # (C, rowsP, KKp)
        itemsize = jnp.dtype(self.compute_dtype).itemsize
        flops = 2 * C * rows_p * KKp * n_pad
        bytes_accessed = (bank.size * itemsize + patches.size * itemsize
                          + C * Fbp * n_pad * 4)

        kernel = functools.partial(_gabor_conv_kernel, n_thetas=T, fb=Fbp)

        # --- hot path: one fused matmul + theta-max per (channel, N tile) ----
        out = pl.pallas_call(
            kernel,
            out_shape=jax.ShapeDtypeStruct((C, Fbp, n_pad), jnp.float32),
            grid_spec=pltpu.PrefetchScalarGridSpec(
                num_scalar_prefetch=0,
                grid=(C, n_tiles),
                in_specs=[
                    # Bank block depends only on the outer channel axis ->
                    # re-DMA'd once per channel (~344 KiB), amortized over all
                    # batches/pixels.  (A single-buffer pl.Buffered(1) would
                    # save one copy; not worth it at this size.)
                    pl.BlockSpec((pl.Squeezed(), rows_p, KKp),
                                 lambda c, n: (c, 0, 0)),
                    pl.BlockSpec((pl.Squeezed(), KKp, tn),
                                 lambda c, n: (c, 0, n)),
                ],
                # Keep TN on the lane axis: lane-dense, unmasked output stores.
                out_specs=pl.BlockSpec((pl.Squeezed(), Fbp, tn),
                                       lambda c, n: (c, 0, n)),
            ),
            compiler_params=pltpu.CompilerParams(
                # Both axes independent; on 2-TC parts the compiler may shard
                # either -- n_tiles is the large one, and C stays the slow axis
                # so per-channel bank reuse is preserved either way.
                dimension_semantics=("parallel", "parallel"),
                vmem_limit_bytes=int(vmem_limit)),
            cost_estimate=pl.CostEstimate(flops=flops, transcendentals=0,
                                          bytes_accessed=bytes_accessed),
        )(bank, patches)

        # --- glue: un-pad / un-fold back to NCHW ------------------------------
        out = out[:, :Fb, :n_total].reshape(C, Fb, B, HWp)[:, :, :, :HW]
        out = out.reshape(C, Fb, B, H, W)
        out = jnp.transpose(out, (2, 0, 1, 3, 4)).reshape(B, C * Fb, H, W)
        return out


def _reference(x, gb8, rotation_invariant=True, quantize=None):
    """Pure-JAX reference via lax grouped conv (mirrors the PyTorch forward).

    quantize=jnp.bfloat16 reproduces the kernel's bf16-input / f32-accumulate
    numerics (up to accumulation order); quantize=None is the full-f32
    PyTorch-equivalent reference.
    """
    B, C, H, W = x.shape
    nS, nL, nG, nP, nT, K, _ = gb8.shape[1:]
    F = nS * nL * nG * nP * nT
    w = gb8.reshape(C * F, 1, K, K)
    R = (K - 1) // 2
    precision = None
    if quantize is not None:
        x = x.astype(quantize)
        w = w.astype(quantize)
    else:
        precision = jax.lax.Precision.HIGHEST
    res = jax.lax.conv_general_dilated(
        x, w, window_strides=(1, 1), padding=((R, R), (R, R)),
        dimension_numbers=("NCHW", "OIHW", "NCHW"),
        feature_group_count=C, precision=precision,
        preferred_element_type=jnp.float32)
    if rotation_invariant:
        res = res.reshape(B, C, F // nT, nT, H, W).max(axis=3)
    return res.reshape(B, -1, H, W)


if __name__ == "__main__":
    B, C, H, W = 2, 4, 16, 16
    key = jax.random.PRNGKey(0)
    x = jax.random.normal(key, (B, C, H, W), dtype=jnp.float32)

    # 3 sigmas, 4 lambdas, 1 gamma, 2 psis, 7 thetas, kernel_radius=15
    mod = GaborFiltersPallas(in_channels=C)
    out = jax.block_until_ready(mod(x))

    # Tight check: reference with the same bf16-input / f32-accumulate numerics.
    ref_bf16 = jax.block_until_ready(
        _reference(x, mod.gb, mod.rotation_invariant, quantize=jnp.bfloat16))
    # Loose check: full-f32 reference (PyTorch module numerics).
    ref_f32 = jax.block_until_ready(
        _reference(x, mod.gb, mod.rotation_invariant, quantize=None))

    assert out.shape == ref_f32.shape == (B, C * 24, H, W), (out.shape,
                                                             ref_f32.shape)
    err_q = float(jnp.max(jnp.abs(out - ref_bf16)))
    assert jnp.allclose(out, ref_bf16, atol=1e-2, rtol=1e-2), err_q
    err_f = float(jnp.max(jnp.abs(out - ref_f32)))
    assert jnp.allclose(out, ref_f32, atol=1.0, rtol=5e-2), err_f
    print("KERNEL_OK")
</pallas_src>

<mosaic_0001>
module attributes {stable_mosaic.version = 11 : i64} {
  func.func @_gabor_conv_kernel(%arg0: i32, %arg1: i32, %arg2: memref<1x176x976xbf16, #tpu.memory_space<vmem>>, %arg3: memref<1x976x512xbf16, #tpu.memory_space<vmem>>, %arg4: memref<1x24x512xf32, #tpu.memory_space<vmem>>) attributes {dimension_semantics = [#tpu.dimension_semantics<parallel>, #tpu.dimension_semantics<parallel>], iteration_bounds = array<i64: 4, 1>, scalar_prefetch = 0 : i64, scratch_operands = 0 : i64, tpu.core_type = #tpu.core_type<tc>, window_params = [{transform_indices = @transform_0, window_bounds = array<i64: 1, 176, 976>}, {transform_indices = @transform_1, window_bounds = array<i64: 1, 976, 512>}, {transform_indices = @transform_2, window_bounds = array<i64: 1, 24, 512>}]} {
    %c0 = arith.constant 0 : index
    %c0_0 = arith.constant 0 : index
    %c0_1 = arith.constant 0 : index
    %0 = vector.load %arg2[%c0, %c0_0, %c0_1] : memref<1x176x976xbf16, #tpu.memory_space<vmem>>, vector<1x176x976xbf16>
    %1 = vector.shape_cast %0 : vector<1x176x976xbf16> to vector<176x976xbf16>
    %c0_2 = arith.constant 0 : index
    %c0_3 = arith.constant 0 : index
    %c0_4 = arith.constant 0 : index
    %2 = vector.load %arg3[%c0_2, %c0_3, %c0_4] : memref<1x976x512xbf16, #tpu.memory_space<vmem>>, vector<1x976x512xbf16>
    %3 = vector.shape_cast %2 : vector<1x976x512xbf16> to vector<976x512xbf16>
    %cst = arith.constant dense<0.000000e+00> : vector<176x512xf32>
    %4 = tpu.matmul %1, %3, %cst {dimension_numbers = #tpu.dot_dimension_numbers<[1], [0], [0], [1], [0, 0, 1, 1], [], []>} : vector<176x976xbf16>, vector<976x512xbf16>, vector<176x512xf32> -> vector<176x512xf32>
    %5 = vector.extract_strided_slice %4 {offsets = [0, 0], sizes = [24, 512], strides = [1, 1]} : vector<176x512xf32> to vector<24x512xf32>
    %6 = vector.extract_strided_slice %4 {offsets = [24, 0], sizes = [24, 512], strides = [1, 1]} : vector<176x512xf32> to vector<24x512xf32>
    %7 = arith.maximumf %5, %6 : vector<24x512xf32>
    %8 = vector.extract_strided_slice %4 {offsets = [48, 0], sizes = [24, 512], strides = [1, 1]} : vector<176x512xf32> to vector<24x512xf32>
    %9 = arith.maximumf %7, %8 : vector<24x512xf32>
    %10 = vector.extract_strided_slice %4 {offsets = [72, 0], sizes = [24, 512], strides = [1, 1]} : vector<176x512xf32> to vector<24x512xf32>
    %11 = arith.maximumf %9, %10 : vector<24x512xf32>
    %12 = vector.extract_strided_slice %4 {offsets = [96, 0], sizes = [24, 512], strides = [1, 1]} : vector<176x512xf32> to vector<24x512xf32>
    %13 = arith.maximumf %11, %12 : vector<24x512xf32>
    %14 = vector.extract_strided_slice %4 {offsets = [120, 0], sizes = [24, 512], strides = [1, 1]} : vector<176x512xf32> to vector<24x512xf32>
    %15 = arith.maximumf %13, %14 : vector<24x512xf32>
    %16 = vector.extract_strided_slice %4 {offsets = [144, 0], sizes = [24, 512], strides = [1, 1]} : vector<176x512xf32> to vector<24x512xf32>
    %17 = arith.maximumf %15, %16 : vector<24x512xf32>
    %c0_5 = arith.constant 0 : index
    %c0_6 = arith.constant 0 : index
    %c0_7 = arith.constant 0 : index
    %18 = vector.load %arg4[%c0_5, %c0_6, %c0_7] : memref<1x24x512xf32, #tpu.memory_space<vmem>>, vector<1x24x512xf32>
    %19 = vector.shape_cast %18 : vector<1x24x512xf32> to vector<24x512xf32>
    %20 = vector.shape_cast %17 : vector<24x512xf32> to vector<1x24x512xf32>
    tpu.vector_store %arg4[%c0_5, %c0_6, %c0_7], %20 {strides = array<i32>} : memref<1x24x512xf32, #tpu.memory_space<vmem>>, vector<1x24x512xf32>,
    return
  }
  func.func @transform_0(%arg0: i32, %arg1: i32) -> (i32, i32, i32) {
    %c0_i32 = arith.constant 0 : i32
    %c0_i32_0 = arith.constant 0 : i32
    %c0_i32_1 = arith.constant 0 : i32
    return %arg0, %c0_i32, %c0_i32_0 : i32, i32, i32
  }
  func.func @transform_1(%arg0: i32, %arg1: i32) -> (i32, i32, i32) {
    %c0_i32 = arith.constant 0 : i32
    %c0_i32_0 = arith.constant 0 : i32
    return %arg0, %c0_i32, %arg1 : i32, i32, i32
  }
  func.func @transform_2(%arg0: i32, %arg1: i32) -> (i32, i32, i32) {
    %c0_i32 = arith.constant 0 : i32
    %c0_i32_0 = arith.constant 0 : i32
    return %arg0, %c0_i32, %arg1 : i32, i32, i32
  }
}

</mosaic_0001>

<llo_original>
// kernel: tpu_custom_call.1
$region0: #{tpu_custom_call.1}
  #allocation0 [shape = 'u32[]', space=smem, size = 0x4, offset = 0x4, fixed_abs, tag = 'smem constant byte address 0x4 - core index']
  #allocation1 [shape = 'u32[144,128]{1,0:T(1,128)}', space=vmem, size = 0x12000, scoped, tag = 'internal scratch']
  %s0 = inlined_call_operand.hbm [shape: bf16[4,176,976], index: 0, kind: input, shape index: {}]
  %s1 = inlined_call_operand.hbm [shape: bf16[4,976,512], index: 1, kind: input, shape index: {}]
  %s2 = inlined_call_operand.hbm [shape: f32[4,24,512], index: 2, kind: output, shape index: {}]
  %s3 = sld [smem:[#allocation0]]
  $region49: #{tpu_custom_call.1} parent=0
    _
  %s5 = ssub.s32 1, %s3
  %s6 = scalar_select 0, %s5, %s3
  $region1: #{tpu_custom_call.1} parent=0
    #allocation2 [shape = 'u8[720896]{0}', space=vmem, size = 0xb0000, scoped, tag = 'input window, operand 0']
    #allocation3 [shape = 's32[2]{0}', space=sflag, size = 0x8, scoped, tag = 'scoped memory for tpu_custom_call.1']
    #allocation4 [shape = 's32[2]{0}', space=sflag, size = 0x8, scoped, tag = 'scoped memory for tpu_custom_call.1']
    #allocation5 [shape = 'u8[1998848]{0}', space=vmem, size = 0x1e8000, scoped, tag = 'input window, operand 1']
    #allocation6 [shape = 's32[2]{0}', space=sflag, size = 0x8, scoped, tag = 'scoped memory for tpu_custom_call.1']
    #allocation7 [shape = 'u8[98304]{0}', space=vmem, size = 0x18000, scoped, tag = 'output window, operand 0']
    %7 = vsyncpa [#allocation3], 0
    %s8 = scalar_lea.sflag [#allocation3], 1
    %9 = vsyncpa %s8, 0
    %10 = vsyncpa [#allocation6], 0
    %s11 = scalar_lea.sflag [#allocation6], 1
    %12 = vsyncpa %s11, 0
    %13 = vsyncpa [#allocation4], 0
    %s14 = scalar_lea.sflag [#allocation4], 1
    %15 = vsyncpa %s14, 0
    loop: start=0, step=1, limit=6
    $region2: #{tpu_custom_call.1} parent=1 // loop_pre_header
      _
    $region3: #{tpu_custom_call.1} parent=1 // loop_header
      %s17 = sphi 0, %s21
      %p18 = scmp.ge.s32.totalorder %s17, 6
      %s24 = sphi 0, %s36
      %s25 = sphi 0, %s32
      %s26 = sphi 0, %s24
      %s27 = sphi 0, %s25
      %s28 = sphi 0, %s26
      %s29 = sphi 0, %s27
      %s39 = sphi 0, %s41
      %s42 = sphi 0, %s39
      %s43 = sphi 0, %s42
      %s59 = sphi 0, %s43
      %s67 = sphi 0, %s69
      %s70 = sphi 0, %s67
      %s71 = sphi 0, %s70
      %s87 = sphi 0, %s71
      %s95 = sphi 0, %s97
      %s98 = sphi 0, %s95
      %s99 = sphi 0, %s98
      %s115 = sphi 0, %s99
    $region4: #{tpu_custom_call.1} parent=1 // loop_header_branch
      %20 = sbr.rel (%p18) target = $region8
    $region5: #{tpu_custom_call.1} parent=1 // loop_body
      %s22 = ssub.s32 %s17, 1
      %s23 = ssub.s32 %s17, 2
      %s30 = sadd.s32 1, %s25
      %p31 = scmp.ge.s32.totalorder %s30, 1
      %s32 = scalar_select %p31, 0, %s30
      %s33 = sadd.s32 1, %s24
      %s34 = scalar_select %p31, %s33, %s24
      %p35 = scmp.ge.s32.totalorder %s34, 4
      %s36 = scalar_select %p35, 0, %s34
      %s37 = ssub.s32 %s24, %s36
      %p38 = scmp.eq.s32.totalorder %s37, 0
      %s40 = sadd.s32 %s39, 1
      %s41 = scalar_select %p38, %s39, %s40
      %p44 = pneg %p38
      %p45 = scmp.eq.s32.totalorder %s17, 3
      %p46 = por %p44, %p45
      %p47 = scmp.ne.s32.totalorder %s39, %s42
      %p48 = scmp.eq.s32.totalorder %s17, 0
      %p49 = por %p47, %p48
      %p50 = scmp.ne.s32.totalorder %s39, %s42
      %p51 = scmp.eq.s32.totalorder %s22, 3
      %p52 = por %p50, %p51
      %p53 = scmp.ne.s32.totalorder %s42, %s43
      %p54 = scmp.eq.s32.totalorder %s22, 0
      %p55 = por %p53, %p54
      %p56 = scmp.ne.s32.totalorder %s42, %s43
      %p57 = scmp.eq.s32.totalorder %s23, 3
      %p58 = por %p56, %p57
      %p60 = scmp.ne.s32.totalorder %s43, %s59
      %p61 = scmp.eq.s32.totalorder %s23, 0
      %p62 = por %p60, %p61
      %s63 = ssub.s32 %s24, %s36
      %s64 = ssub.s32 %s25, %s32
      %s65 = sor.u32 %s63, %s64
      %p66 = scmp.eq.s32.totalorder %s65, 0
      %s68 = sadd.s32 %s67, 1
      %s69 = scalar_select %p66, %s67, %s68
      %p72 = pneg %p66
      %p73 = scmp.eq.s32.totalorder %s17, 3
      %p74 = por %p72, %p73
      %p75 = scmp.ne.s32.totalorder %s67, %s70
      %p76 = scmp.eq.s32.totalorder %s17, 0
      %p77 = por %p75, %p76
      %p78 = scmp.ne.s32.totalorder %s67, %s70
      %p79 = scmp.eq.s32.totalorder %s22, 3
      %p80 = por %p78, %p79
      %p81 = scmp.ne.s32.totalorder %s70, %s71
      %p82 = scmp.eq.s32.totalorder %s22, 0
      %p83 = por %p81, %p82
      %p84 = scmp.ne.s32.totalorder %s70, %s71
      %p85 = scmp.eq.s32.totalorder %s23, 3
      %p86 = por %p84, %p85
      %p88 = scmp.ne.s32.totalorder %s71, %s87
      %p89 = scmp.eq.s32.totalorder %s23, 0
      %p90 = por %p88, %p89
      %s91 = ssub.s32 %s24, %s36
      %s92 = ssub.s32 %s25, %s32
      %s93 = sor.u32 %s91, %s92
      %p94 = scmp.eq.s32.totalorder %s93, 0
      %s96 = sadd.s32 %s95, 1
      %s97 = scalar_select %p94, %s95, %s96
      %p100 = pneg %p94
      %p101 = scmp.eq.s32.totalorder %s17, 3
      %p102 = por %p100, %p101
      %p103 = scmp.ne.s32.totalorder %s95, %s98
      %p104 = scmp.eq.s32.totalorder %s17, 0
      %p105 = por %p103, %p104
      %p106 = scmp.ne.s32.totalorder %s95, %s98
      %p107 = scmp.eq.s32.totalorder %s22, 3
      %p108 = por %p106, %p107
      %p109 = scmp.ne.s32.totalorder %s98, %s99
      %p110 = scmp.eq.s32.totalorder %s22, 0
      %p111 = por %p109, %p110
      %p112 = scmp.ne.s32.totalorder %s98, %s99
      %p113 = scmp.eq.s32.totalorder %s23, 3
      %p114 = por %p112, %p113
      %p116 = scmp.ne.s32.totalorder %s99, %s115
      %p117 = scmp.eq.s32.totalorder %s23, 0
      %p118 = por %p116, %p117
      %p119 = scmp.le.s32.totalorder 1, %s17
      %p120 = scmp.lt.s32.totalorder %s17, 5
      %p121 = pnand %p119, %p120
      %p122 = pneg %p121
      // Predicated region
      $region9: #{tpu_custom_call.1} parent=5 // pred_check
        _
      $region10: #{tpu_custom_call.1} parent=5 // pred_check_branch
        %124 = sbr.rel (%p121) target = $region12
      $region11: #{tpu_custom_call.1} parent=5 // pred_region
        %s125 = ssub.s32 %s17, 1
      $region12: #{tpu_custom_call.1} parent=5 // pred_fallthru
        _
      %p126 = scmp.lt.s32.totalorder %s17, 4
      // Predicated region
      $region13: #{tpu_custom_call.1} parent=5 // pred_check
        %p127 = pneg %p126
      $region14: #{tpu_custom_call.1} parent=5 // pred_check_branch
        %129 = sbr.rel (%p127) target = $region16
      $region15: #{tpu_custom_call.1} parent=5 // pred_region
        // Predicated region
        $region17: #{tpu_custom_call.1} parent=15 // pred_check
          %p130 = pneg %p49
        $region18: #{tpu_custom_call.1} parent=15 // pred_check_branch
          %132 = sbr.rel (%p130) target = $region20
        $region19: #{tpu_custom_call.1} parent=15 // pred_region
          %s133 = sand.u32 %s39, 1
          %s134 = scalar_lea.sflag [#allocation3], %s133
          %s135 = sand.u32 %s39, 1
          %s136 = smul.addr %s135, 704
          %s137 = scalar_lea.vmem [#allocation2], %s136
          %s139 = ssub.s32 11264, 11264
          %140 = vsyncadd %s134, %s139
          %s141 = smul.addr %s24, 176
          %s142 = smul.addr %s141, 64
          %s143 = scalar_lea.hbm %s0, %s142
          %s144 = sshll.u32 %s137, 4
          %s145 = int_to_ptr.vmem [resolvable:$true] %s144
          %150 = dma.hbm_to_vmem [thread:$0]  %s143, 11264, %s145, %s134, 512, 512, 32
        $region20: #{tpu_custom_call.1} parent=15 // pred_fallthru
          _
        // Predicated region
        $region21: #{tpu_custom_call.1} parent=15 // pred_check
          %p151 = pneg %p77
        $region22: #{tpu_custom_call.1} parent=15 // pred_check_branch
          %153 = sbr.rel (%p151) target = $region24
        $region23: #{tpu_custom_call.1} parent=15 // pred_region
          %s154 = sand.u32 %s67, 1
          %s155 = scalar_lea.sflag [#allocation6], %s154
          %s156 = sand.u32 %s67, 1
          %s157 = smul.addr %s156, 1952
          %s158 = scalar_lea.vmem [#allocation5], %s157
          %s159 = smul.u32 4, %s25
          %s161 = ssub.s32 31232, 31232
          %162 = vsyncadd %s155, %s161
          %s163 = smul.addr %s24, 488
          %s164 = sadd.s32 %s159, %s163
          %s165 = smul.addr %s164, 64
          %s166 = scalar_lea.hbm %s1, %s165
          %s167 = sshll.u32 %s158, 4
          %s168 = int_to_ptr.vmem [resolvable:$true] %s167
          %173 = dma.hbm_to_vmem [thread:$0]  %s166, 31232, %s168, %s155, 256, 256, 16
        $region24: #{tpu_custom_call.1} parent=15 // pred_fallthru
          _
      $region16: #{tpu_custom_call.1} parent=5 // pred_fallthru
        _
      %p174 = scmp.le.s32.totalorder 1, %s17
      %p175 = scmp.lt.s32.totalorder %s17, 5
      %p176 = pnand %p174, %p175
      %p177 = pneg %p176
      // Predicated region
      $region25: #{tpu_custom_call.1} parent=5 // pred_check
        _
      $region26: #{tpu_custom_call.1} parent=5 // pred_check_branch
        %179 = sbr.rel (%p176) target = $region28
      $region27: #{tpu_custom_call.1} parent=5 // pred_region
        %s180 = ssub.s32 %s17, 1
        %s181 = sand.u32 %s42, 1
        %s182 = scalar_lea.sflag [#allocation3], %s181
        %s183 = sand.u32 %s42, 1
        %s184 = smul.addr %s183, 704
        %s185 = scalar_lea.vmem [#allocation2], %s184
        // Predicated region
        $region29: #{tpu_custom_call.1} parent=27 // pred_check
          %p186 = pneg %p55
        $region30: #{tpu_custom_call.1} parent=27 // pred_check_branch
          %188 = sbr.rel (%p186) target = $region32
        $region31: #{tpu_custom_call.1} parent=27 // pred_region
          %189 = dma.done %s182, 11264
        $region32: #{tpu_custom_call.1} parent=27 // pred_fallthru
          _
        %s190 = sand.u32 %s70, 1
        %s191 = scalar_lea.sflag [#allocation6], %s190
        %s192 = sand.u32 %s70, 1
        %s193 = smul.addr %s192, 1952
        %s194 = scalar_lea.vmem [#allocation5], %s193
        // Predicated region
        $region33: #{tpu_custom_call.1} parent=27 // pred_check
          %p195 = pneg %p83
        $region34: #{tpu_custom_call.1} parent=27 // pred_check_branch
          %197 = sbr.rel (%p195) target = $region36
        $region35: #{tpu_custom_call.1} parent=27 // pred_region
          %198 = dma.done %s191, 31232
        $region36: #{tpu_custom_call.1} parent=27 // pred_fallthru
          _
        %s199 = sand.u32 %s42, 1
        %s200 = scalar_lea.sflag [#allocation3], %s199
        %s201 = sand.u32 %s42, 1
        %s202 = smul.addr %s201, 704
        %s203 = scalar_lea.vmem [#allocation2], %s202
        %p204 = pneg %p55
        %p205 = pneg %p52
        %s206 = sand.u32 %s70, 1
        %s207 = scalar_lea.sflag [#allocation6], %s206
        %s208 = sand.u32 %s70, 1
        %s209 = smul.addr %s208, 1952
        %s210 = scalar_lea.vmem [#allocation5], %s209
        %p211 = pneg %p83
        %p212 = pneg %p80
        %p213 = pneg %p111
        %p214 = pneg %p108
        %s215 = sand.u32 %s98, 1
        %s216 = scalar_lea.sflag [#allocation4], %s215
        %s217 = sand.u32 %s98, 1
        %s218 = smul.addr %s217, 96
        %s219 = scalar_lea.vmem [#allocation7], %s218
        %s220 = smul.u32 4, %s27
        %s221 = smul.u32 4, %s27
        %v223 = vld [vmem:[%s185] sm:$0xff]
        %v224 = vld [vmem:[%s185 + $0x8] sm:$0xff]
        %v225 = vld [vmem:[%s185 + $0x10] sm:$0xff]
        %v226 = vld [vmem:[%s185 + $0x18] sm:$0xff]
        %v227 = vld [vmem:[%s185 + $0x20] sm:$0xff]
        %v228 = vld [vmem:[%s185 + $0x28] sm:$0xff]
        %v229 = vld [vmem:[%s185 + $0x30] sm:$0xff]
        %v230 = vld [vmem:[%s185 + $0x38] sm:$0xff]
        %v231 = vld [vmem:[%s185 + $0x40] sm:$0xff]
        %v232 = vld [vmem:[%s185 + $0x48] sm:$0xff]
        %v233 = vld [vmem:[%s185 + $0x50] sm:$0xff]
        %v234 = vld [vmem:[%s185 + $0x58] sm:$0xff]
        %v235 = vld [vmem:[%s185 + $0x60] sm:$0xff]
        %v236 = vld [vmem:[%s185 + $0x68] sm:$0xff]
        %v237 = vld [vmem:[%s185 + $0x70] sm:$0xff]
        %v238 = vld [vmem:[%s185 + $0x78] sm:$0xff]
        %v239 = vld [vmem:[%s185 + $0x80] sm:$0xff]
        %v240 = vld [vmem:[%s185 + $0x88] sm:$0xff]
        %v241 = vld [vmem:[%s185 + $0x90] sm:$0xff]
        %v242 = vld [vmem:[%s185 + $0x98] sm:$0xff]
        %v243 = vld [vmem:[%s185 + $0xa0] sm:$0xff]
        %v244 = vld [vmem:[%s185 + $0xa8] sm:$0xff]
        %v245 = vld [vmem:[%s185 + $0xb0] sm:$0xff]
        %v246 = vld [vmem:[%s185 + $0xb8] sm:$0xff]
        %v247 = vld [vmem:[%s185 + $0xc0] sm:$0xff]
        %v248 = vld [vmem:[%s185 + $0xc8] sm:$0xff]
        %v249 = vld [vmem:[%s185 + $0xd0] sm:$0xff]
        %v250 = vld [vmem:[%s185 + $0xd8] sm:$0xff]
        %v251 = vld [vmem:[%s185 + $0xe0] sm:$0xff]
        %v252 = vld [vmem:[%s185 + $0xe8] sm:$0xff]
        %v253 = vld [vmem:[%s185 + $0xf0] sm:$0xff]
        %v254 = vld [vmem:[%s185 + $0xf8] sm:$0xff]
        %v255 = vld [vmem:[%s185 + $0x100] sm:$0xff]
        %v256 = vld [vmem:[%s185 + $0x108] sm:$0xff]
        %v257 = vld [vmem:[%s185 + $0x110] sm:$0xff]
        %v258 = vld [vmem:[%s185 + $0x118] sm:$0xff]
        %v259 = vld [vmem:[%s185 + $0x120] sm:$0xff]
        %v260 = vld [vmem:[%s185 + $0x128] sm:$0xff]
        %v261 = vld [vmem:[%s185 + $0x130] sm:$0xff]
        %v262 = vld [vmem:[%s185 + $0x138] sm:$0xff]
        %v263 = vld [vmem:[%s185 + $0x140] sm:$0xff]
        %v264 = vld [vmem:[%s185 + $0x148] sm:$0xff]
        %v265 = vld [vmem:[%s185 + $0x150] sm:$0xff]
        %v266 = vld [vmem:[%s185 + $0x158] sm:$0xff]
        %v267 = vld [vmem:[%s185 + $0x160] sm:$0xff]
        %v268 = vld [vmem:[%s185 + $0x168] sm:$0xff]
        %v269 = vld [vmem:[%s185 + $0x170] sm:$0xff]
        %v270 = vld [vmem:[%s185 + $0x178] sm:$0xff]
        %v271 = vld [vmem:[%s185 + $0x180] sm:$0xff]
        %v272 = vld [vmem:[%s185 + $0x188] sm:$0xff]
        %v273 = vld [vmem:[%s185 + $0x190] sm:$0xff]
        %v274 = vld [vmem:[%s185 + $0x198] sm:$0xff]
        %v275 = vld [vmem:[%s185 + $0x1a0] sm:$0xff]
        %v276 = vld [vmem:[%s185 + $0x1a8] sm:$0xff]
        %v277 = vld [vmem:[%s185 + $0x1b0] sm:$0xff]
        %v278 = vld [vmem:[%s185 + $0x1b8] sm:$0xff]
        %v279 = vld [vmem:[%s185 + $0x1c0] sm:$0xff]
        %v280 = vld [vmem:[%s185 + $0x1c8] sm:$0xff]
        %v281 = vld [vmem:[%s185 + $0x1d0] sm:$0xff]
        %v282 = vld [vmem:[%s185 + $0x1d8] sm:$0xff]
        %v283 = vld [vmem:[%s185 + $0x1e0] sm:$0xff]
        %v284 = vld [vmem:[%s185 + $0x1e8] sm:$0xff]
        %v285 = vld [vmem:[%s185 + $0x1f0] sm:$0xff]
        %v286 = vld [vmem:[%s185 + $0x1f8] sm:$0xff]
        %v287 = vld [vmem:[%s185 + $0x200] sm:$0xff]
        %v288 = vld [vmem:[%s185 + $0x208] sm:$0xff]
        %v289 = vld [vmem:[%s185 + $0x210] sm:$0xff]
        %v290 = vld [vmem:[%s185 + $0x218] sm:$0xff]
        %v291 = vld [vmem:[%s185 + $0x220] sm:$0xff]
        %v292 = vld [vmem:[%s185 + $0x228] sm:$0xff]
        %v293 = vld [vmem:[%s185 + $0x230] sm:$0xff]
        %v294 = vld [vmem:[%s185 + $0x238] sm:$0xff]
        %v295 = vld [vmem:[%s185 + $0x240] sm:$0xff]
        %v296 = vld [vmem:[%s185 + $0x248] sm:$0xff]
        %v297 = vld [vmem:[%s185 + $0x250] sm:$0xff]
        %v298 = vld [vmem:[%s185 + $0x258] sm:$0xff]
        %v299 = vld [vmem:[%s185 + $0x260] sm:$0xff]
        %v300 = vld [vmem:[%s185 + $0x268] sm:$0xff]
        %v301 = vld [vmem:[%s185 + $0x270] sm:$0xff]
        %v302 = vld [vmem:[%s185 + $0x278] sm:$0xff]
        %v303 = vld [vmem:[%s185 + $0x280] sm:$0xff]
        %v304 = vld [vmem:[%s185 + $0x288] sm:$0xff]
        %v305 = vld [vmem:[%s185 + $0x290] sm:$0xff]
        %v306 = vld [vmem:[%s185 + $0x298] sm:$0xff]
        %v307 = vld [vmem:[%s185 + $0x2a0] sm:$0xff]
        %v308 = vld [vmem:[%s185 + $0x2a8] sm:$0xff]
        %v309 = vld [vmem:[%s185 + $0x2b0] sm:$0xff]
        %v310 = vld [vmem:[%s185 + $0x2b8] sm:$0xff]
        %v311 = vld [vmem:[%s194] sm:$0xff]
        %v312 = vld [vmem:[%s194 + $0x8] sm:$0xff]
        %v313 = vld [vmem:[%s194 + $0x10] sm:$0xff]
        %v314 = vld [vmem:[%s194 + $0x18] sm:$0xff]
        %v315 = vld [vmem:[%s194 + $0x20] sm:$0xff]
        %v316 = vld [vmem:[%s194 + $0x28] sm:$0xff]
        %v317 = vld [vmem:[%s194 + $0x30] sm:$0xff]
        %v318 = vld [vmem:[%s194 + $0x38] sm:$0xff]
        %v319 = vld [vmem:[%s194 + $0x40] sm:$0xff]
        %v320 = vld [vmem:[%s194 + $0x48] sm:$0xff]
        %v321 = vld [vmem:[%s194 + $0x50] sm:$0xff]
        %v322 = vld [vmem:[%s194 + $0x58] sm:$0xff]
        %v323 = vld [vmem:[%s194 + $0x60] sm:$0xff]
        %v324 = vld [vmem:[%s194 + $0x68] sm:$0xff]
        %v325 = vld [vmem:[%s194 + $0x70] sm:$0xff]
        %v326 = vld [vmem:[%s194 + $0x78] sm:$0xff]
        %v327 = vld [vmem:[%s194 + $0x80] sm:$0xff]
        %v328 = vld [vmem:[%s194 + $0x88] sm:$0xff]
        %v329 = vld [vmem:[%s194 + $0x90] sm:$0xff]
        %v330 = vld [vmem:[%s194 + $0x98] sm:$0xff]
        %v331 = vld [vmem:[%s194 + $0xa0] sm:$0xff]
        %v332 = vld [vmem:[%s194 + $0xa8] sm:$0xff]
        %v333 = vld [vmem:[%s194 + $0xb0] sm:$0xff]
        %v334 = vld [vmem:[%s194 + $0xb8] sm:$0xff]
        %v335 = vld [vmem:[%s194 + $0xc0] sm:$0xff]
        %v336 = vld [vmem:[%s194 + $0xc8] sm:$0xff]
        %v337 = vld [vmem:[%s194 + $0xd0] sm:$0xff]
        %v338 = vld [vmem:[%s194 + $0xd8] sm:$0xff]
        %v339 = vld [vmem:[%s194 + $0xe0] sm:$0xff]
        %v340 = vld [vmem:[%s194 + $0xe8] sm:$0xff]
        %v341 = vld [vmem:[%s194 + $0xf0] sm:$0xff]
        %v342 = vld [vmem:[%s194 + $0xf8] sm:$0xff]
        %v343 = vld [vmem:[%s194 + $0x100] sm:$0xff]
        %v344 = vld [vmem:[%s194 + $0x108] sm:$0xff]
        %v345 = vld [vmem:[%s194 + $0x110] sm:$0xff]
        %v346 = vld [vmem:[%s194 + $0x118] sm:$0xff]
        %v347 = vld [vmem:[%s194 + $0x120] sm:$0xff]
        %v348 = vld [vmem:[%s194 + $0x128] sm:$0xff]
        %v349 = vld [vmem:[%s194 + $0x130] sm:$0xff]
        %v350 = vld [vmem:[%s194 + $0x138] sm:$0xff]
        %v351 = vld [vmem:[%s194 + $0x140] sm:$0xff]
        %v352 = vld [vmem:[%s194 + $0x148] sm:$0xff]
        %v353 = vld [vmem:[%s194 + $0x150] sm:$0xff]
        %v354 = vld [vmem:[%s194 + $0x158] sm:$0xff]
        %v355 = vld [vmem:[%s194 + $0x160] sm:$0xff]
        %v356 = vld [vmem:[%s194 + $0x168] sm:$0xff]
        %v357 = vld [vmem:[%s194 + $0x170] sm:$0xff]
        %v358 = vld [vmem:[%s194 + $0x178] sm:$0xff]
        %v359 = vld [vmem:[%s194 + $0x180] sm:$0xff]
        %v360 = vld [vmem:[%s194 + $0x188] sm:$0xff]
        %v361 = vld [vmem:[%s194 + $0x190] sm:$0xff]
        %v362 = vld [vmem:[%s194 + $0x198] sm:$0xff]
        %v363 = vld [vmem:[%s194 + $0x1a0] sm:$0xff]
        %v364 = vld [vmem:[%s194 + $0x1a8] sm:$0xff]
        %v365 = vld [vmem:[%s194 + $0x1b0] sm:$0xff]
        %v366 = vld [vmem:[%s194 + $0x1b8] sm:$0xff]
        %v367 = vld [vmem:[%s194 + $0x1c0] sm:$0xff]
        %v368 = vld [vmem:[%s194 + $0x1c8] sm:$0xff]
        %v369 = vld [vmem:[%s194 + $0x1d0] sm:$0xff]
        %v370 = vld [vmem:[%s194 + $0x1d8] sm:$0xff]
        %v371 = vld [vmem:[%s194 + $0x1e0] sm:$0xff]
        %v372 = vld [vmem:[%s194 + $0x1e8] sm:$0xff]
        %v373 = vld [vmem:[%s194 + $0x1f0] sm:$0xff]
        %v374 = vld [vmem:[%s194 + $0x1f8] sm:$0xff]
        %v375 = vld [vmem:[%s194 + $0x200] sm:$0xff]
        %v376 = vld [vmem:[%s194 + $0x208] sm:$0xff]
        %v377 = vld [vmem:[%s194 + $0x210] sm:$0xff]
        %v378 = vld [vmem:[%s194 + $0x218] sm:$0xff]
        %v379 = vld [vmem:[%s194 + $0x220] sm:$0xff]
        %v380 = vld [vmem:[%s194 + $0x228] sm:$0xff]
        %v381 = vld [vmem:[%s194 + $0x230] sm:$0xff]
        %v382 = vld [vmem:[%s194 + $0x238] sm:$0xff]
        %v383 = vld [vmem:[%s194 + $0x240] sm:$0xff]
        %v384 = vld [vmem:[%s194 + $0x248] sm:$0xff]
        %v385 = vld [vmem:[%s194 + $0x250] sm:$0xff]
        %v386 = vld [vmem:[%s194 + $0x258] sm:$0xff]
        %v387 = vld [vmem:[%s194 + $0x260] sm:$0xff]
        %v388 = vld [vmem:[%s194 + $0x268] sm:$0xff]
        %v389 = vld [vmem:[%s194 + $0x270] sm:$0xff]
        %v390 = vld [vmem:[%s194 + $0x278] sm:$0xff]
        %v391 = vld [vmem:[%s194 + $0x280] sm:$0xff]
        %v392 = vld [vmem:[%s194 + $0x288] sm:$0xff]
        %v393 = vld [vmem:[%s194 + $0x290] sm:$0xff]
        %v394 = vld [vmem:[%s194 + $0x298] sm:$0xff]
        %v395 = vld [vmem:[%s194 + $0x2a0] sm:$0xff]
        %v396 = vld [vmem:[%s194 + $0x2a8] sm:$0xff]
        %v397 = vld [vmem:[%s194 + $0x2b0] sm:$0xff]
        %v398 = vld [vmem:[%s194 + $0x2b8] sm:$0xff]
        %v399 = vld [vmem:[%s194 + $0x2c0] sm:$0xff]
        %v400 = vld [vmem:[%s194 + $0x2c8] sm:$0xff]
        %v401 = vld [vmem:[%s194 + $0x2d0] sm:$0xff]
        %v402 = vld [vmem:[%s194 + $0x2d8] sm:$0xff]
        %v403 = vld [vmem:[%s194 + $0x2e0] sm:$0xff]
        %v404 = vld [vmem:[%s194 + $0x2e8] sm:$0xff]
        %v405 = vld [vmem:[%s194 + $0x2f0] sm:$0xff]
        %v406 = vld [vmem:[%s194 + $0x2f8] sm:$0xff]
        %v407 = vld [vmem:[%s194 + $0x300] sm:$0xff]
        %v408 = vld [vmem:[%s194 + $0x308] sm:$0xff]
        %v409 = vld [vmem:[%s194 + $0x310] sm:$0xff]
        %v410 = vld [vmem:[%s194 + $0x318] sm:$0xff]
        %v411 = vld [vmem:[%s194 + $0x320] sm:$0xff]
        %v412 = vld [vmem:[%s194 + $0x328] sm:$0xff]
        %v413 = vld [vmem:[%s194 + $0x330] sm:$0xff]
        %v414 = vld [vmem:[%s194 + $0x338] sm:$0xff]
        %v415 = vld [vmem:[%s194 + $0x340] sm:$0xff]
        %v416 = vld [vmem:[%s194 + $0x348] sm:$0xff]
        %v417 = vld [vmem:[%s194 + $0x350] sm:$0xff]
        %v418 = vld [vmem:[%s194 + $0x358] sm:$0xff]
        %v419 = vld [vmem:[%s194 + $0x360] sm:$0xff]
        %v420 = vld [vmem:[%s194 + $0x368] sm:$0xff]
        %v421 = vld [vmem:[%s194 + $0x370] sm:$0xff]
        %v422 = vld [vmem:[%s194 + $0x378] sm:$0xff]
        %v423 = vld [vmem:[%s194 + $0x380] sm:$0xff]
        %v424 = vld [vmem:[%s194 + $0x388] sm:$0xff]
        %v425 = vld [vmem:[%s194 + $0x390] sm:$0xff]
        %v426 = vld [vmem:[%s194 + $0x398] sm:$0xff]
        %v427 = vld [vmem:[%s194 + $0x3a0] sm:$0xff]
        %v428 = vld [vmem:[%s194 + $0x3a8] sm:$0xff]
        %v429 = vld [vmem:[%s194 + $0x3b0] sm:$0xff]
        %v430 = vld [vmem:[%s194 + $0x3b8] sm:$0xff]
        %v431 = vld [vmem:[%s194 + $0x3c0] sm:$0xff]
        %v432 = vld [vmem:[%s194 + $0x3c8] sm:$0xff]
        %v433 = vld [vmem:[%s194 + $0x3d0] sm:$0xff]
        %v434 = vld [vmem:[%s194 + $0x3d8] sm:$0xff]
        %v435 = vld [vmem:[%s194 + $0x3e0] sm:$0xff]
        %v436 = vld [vmem:[%s194 + $0x3e8] sm:$0xff]
        %v437 = vld [vmem:[%s194 + $0x3f0] sm:$0xff]
        %v438 = vld [vmem:[%s194 + $0x3f8] sm:$0xff]
        %v439 = vld [vmem:[%s194 + $0x400] sm:$0xff]
        %v440 = vld [vmem:[%s194 + $0x408] sm:$0xff]
        %v441 = vld [vmem:[%s194 + $0x410] sm:$0xff]
        %v442 = vld [vmem:[%s194 + $0x418] sm:$0xff]
        %v443 = vld [vmem:[%s194 + $0x420] sm:$0xff]
        %v444 = vld [vmem:[%s194 + $0x428] sm:$0xff]
        %v445 = vld [vmem:[%s194 + $0x430] sm:$0xff]
        %v446 = vld [vmem:[%s194 + $0x438] sm:$0xff]
        %v447 = vld [vmem:[%s194 + $0x440] sm:$0xff]
        %v448 = vld [vmem:[%s194 + $0x448] sm:$0xff]
        %v449 = vld [vmem:[%s194 + $0x450] sm:$0xff]
        %v450 = vld [vmem:[%s194 + $0x458] sm:$0xff]
        %v451 = vld [vmem:[%s194 + $0x460] sm:$0xff]
        %v452 = vld [vmem:[%s194 + $0x468] sm:$0xff]
        %v453 = vld [vmem:[%s194 + $0x470] sm:$0xff]
        %v454 = vld [vmem:[%s194 + $0x478] sm:$0xff]
        %v455 = vld [vmem:[%s194 + $0x480] sm:$0xff]
        %v456 = vld [vmem:[%s194 + $0x488] sm:$0xff]
        %v457 = vld [vmem:[%s194 + $0x490] sm:$0xff]
        %v458 = vld [vmem:[%s194 + $0x498] sm:$0xff]
        %v459 = vld [vmem:[%s194 + $0x4a0] sm:$0xff]
        %v460 = vld [vmem:[%s194 + $0x4a8] sm:$0xff]
        %v461 = vld [vmem:[%s194 + $0x4b0] sm:$0xff]
        %v462 = vld [vmem:[%s194 + $0x4b8] sm:$0xff]
        %v463 = vld [vmem:[%s194 + $0x4c0] sm:$0xff]
        %v464 = vld [vmem:[%s194 + $0x4c8] sm:$0xff]
        %v465 = vld [vmem:[%s194 + $0x4d0] sm:$0xff]
        %v466 = vld [vmem:[%s194 + $0x4d8] sm:$0xff]
        %v467 = vld [vmem:[%s194 + $0x4e0] sm:$0xff]
        %v468 = vld [vmem:[%s194 + $0x4e8] sm:$0xff]
        %v469 = vld [vmem:[%s194 + $0x4f0] sm:$0xff]
        %v470 = vld [vmem:[%s194 + $0x4f8] sm:$0xff]
        %v471 = vld [vmem:[%s194 + $0x500] sm:$0xff]
        %v472 = vld [vmem:[%s194 + $0x508] sm:$0xff]
        %v473 = vld [vmem:[%s194 + $0x510] sm:$0xff]
        %v474 = vld [vmem:[%s194 + $0x518] sm:$0xff]
        %v475 = vld [vmem:[%s194 + $0x520] sm:$0xff]
        %v476 = vld [vmem:[%s194 + $0x528] sm:$0xff]
        %v477 = vld [vmem:[%s194 + $0x530] sm:$0xff]
        %v478 = vld [vmem:[%s194 + $0x538] sm:$0xff]
        %v479 = vld [vmem:[%s194 + $0x540] sm:$0xff]
        %v480 = vld [vmem:[%s194 + $0x548] sm:$0xff]
        %v481 = vld [vmem:[%s194 + $0x550] sm:$0xff]
        %v482 = vld [vmem:[%s194 + $0x558] sm:$0xff]
        %v483 = vld [vmem:[%s194 + $0x560] sm:$0xff]
        %v484 = vld [vmem:[%s194 + $0x568] sm:$0xff]
        %v485 = vld [vmem:[%s194 + $0x570] sm:$0xff]
        %v486 = vld [vmem:[%s194 + $0x578] sm:$0xff]
        %v487 = vld [vmem:[%s194 + $0x580] sm:$0xff]
        %v488 = vld [vmem:[%s194 + $0x588] sm:$0xff]
        %v489 = vld [vmem:[%s194 + $0x590] sm:$0xff]
        %v490 = vld [vmem:[%s194 + $0x598] sm:$0xff]
        %v491 = vld [vmem:[%s194 + $0x5a0] sm:$0xff]
        %v492 = vld [vmem:[%s194 + $0x5a8] sm:$0xff]
        %v493 = vld [vmem:[%s194 + $0x5b0] sm:$0xff]
        %v494 = vld [vmem:[%s194 + $0x5b8] sm:$0xff]
        %v495 = vld [vmem:[%s194 + $0x5c0] sm:$0xff]
        %v496 = vld [vmem:[%s194 + $0x5c8] sm:$0xff]
        %v497 = vld [vmem:[%s194 + $0x5d0] sm:$0xff]
        %v498 = vld [vmem:[%s194 + $0x5d8] sm:$0xff]
        %v499 = vld [vmem:[%s194 + $0x5e0] sm:$0xff]
        %v500 = vld [vmem:[%s194 + $0x5e8] sm:$0xff]
        %v501 = vld [vmem:[%s194 + $0x5f0] sm:$0xff]
        %v502 = vld [vmem:[%s194 + $0x5f8] sm:$0xff]
        %v503 = vld [vmem:[%s194 + $0x600] sm:$0xff]
        %v504 = vld [vmem:[%s194 + $0x608] sm:$0xff]
        %v505 = vld [vmem:[%s194 + $0x610] sm:$0xff]
        %v506 = vld [vmem:[%s194 + $0x618] sm:$0xff]
        %v507 = vld [vmem:[%s194 + $0x620] sm:$0xff]
        %v508 = vld [vmem:[%s194 + $0x628] sm:$0xff]
        %v509 = vld [vmem:[%s194 + $0x630] sm:$0xff]
        %v510 = vld [vmem:[%s194 + $0x638] sm:$0xff]
        %v511 = vld [vmem:[%s194 + $0x640] sm:$0xff]
        %v512 = vld [vmem:[%s194 + $0x648] sm:$0xff]
        %v513 = vld [vmem:[%s194 + $0x650] sm:$0xff]
        %v514 = vld [vmem:[%s194 + $0x658] sm:$0xff]
        %v515 = vld [vmem:[%s194 + $0x660] sm:$0xff]
        %v516 = vld [vmem:[%s194 + $0x668] sm:$0xff]
        %v517 = vld [vmem:[%s194 + $0x670] sm:$0xff]
        %v518 = vld [vmem:[%s194 + $0x678] sm:$0xff]
        %v519 = vld [vmem:[%s194 + $0x680] sm:$0xff]
        %v520 = vld [vmem:[%s194 + $0x688] sm:$0xff]
        %v521 = vld [vmem:[%s194 + $0x690] sm:$0xff]
        %v522 = vld [vmem:[%s194 + $0x698] sm:$0xff]
        %v523 = vld [vmem:[%s194 + $0x6a0] sm:$0xff]
        %v524 = vld [vmem:[%s194 + $0x6a8] sm:$0xff]
        %v525 = vld [vmem:[%s194 + $0x6b0] sm:$0xff]
        %v526 = vld [vmem:[%s194 + $0x6b8] sm:$0xff]
        %v527 = vld [vmem:[%s194 + $0x6c0] sm:$0xff]
        %v528 = vld [vmem:[%s194 + $0x6c8] sm:$0xff]
        %v529 = vld [vmem:[%s194 + $0x6d0] sm:$0xff]
        %v530 = vld [vmem:[%s194 + $0x6d8] sm:$0xff]
        %v531 = vld [vmem:[%s194 + $0x6e0] sm:$0xff]
        %v532 = vld [vmem:[%s194 + $0x6e8] sm:$0xff]
        %v533 = vld [vmem:[%s194 + $0x6f0] sm:$0xff]
        %v534 = vld [vmem:[%s194 + $0x6f8] sm:$0xff]
        %v535 = vld [vmem:[%s194 + $0x700] sm:$0xff]
        %v536 = vld [vmem:[%s194 + $0x708] sm:$0xff]
        %v537 = vld [vmem:[%s194 + $0x710] sm:$0xff]
        %v538 = vld [vmem:[%s194 + $0x718] sm:$0xff]
        %v539 = vld [vmem:[%s194 + $0x720] sm:$0xff]
        %v540 = vld [vmem:[%s194 + $0x728] sm:$0xff]
        %v541 = vld [vmem:[%s194 + $0x730] sm:$0xff]
        %v542 = vld [vmem:[%s194 + $0x738] sm:$0xff]
        %v543 = vld [vmem:[%s194 + $0x740] sm:$0xff]
        %v544 = vld [vmem:[%s194 + $0x748] sm:$0xff]
        %v545 = vld [vmem:[%s194 + $0x750] sm:$0xff]
        %v546 = vld [vmem:[%s194 + $0x758] sm:$0xff]
        %v547 = vld [vmem:[%s194 + $0x760] sm:$0xff]
        %v548 = vld [vmem:[%s194 + $0x768] sm:$0xff]
        %v549 = vld [vmem:[%s194 + $0x770] sm:$0xff]
        %v550 = vld [vmem:[%s194 + $0x778] sm:$0xff]
        %v551 = vld [vmem:[%s194 + $0x780] sm:$0xff]
        %v552 = vld [vmem:[%s194 + $0x788] sm:$0xff]
        %v553 = vld [vmem:[%s194 + $0x790] sm:$0xff]
        %v554 = vld [vmem:[%s194 + $0x798] sm:$0xff]
        %v643 = vunpack.c.l.b16 %v223
        %v644 = vunpack.c.h.b16 %v223
        %v645 = vunpack.c.l.b16 %v224
        %v646 = vunpack.c.h.b16 %v224
        %v647 = vunpack.c.l.b16 %v225
        %v648 = vunpack.c.h.b16 %v225
        %v649 = vunpack.c.l.b16 %v226
        %v650 = vunpack.c.h.b16 %v226
        %v651 = vunpack.c.l.b16 %v227
        %v652 = vunpack.c.h.b16 %v227
        %v653 = vunpack.c.l.b16 %v228
        %v654 = vunpack.c.h.b16 %v228
        %v655 = vunpack.c.l.b16 %v229
        %v656 = vunpack.c.h.b16 %v229
        %v657 = vunpack.c.l.b16 %v230
        %v658 = vunpack.c.h.b16 %v230
        %v659 = vunpack.c.l.b16 %v231
        %v660 = vunpack.c.h.b16 %v231
        %v661 = vunpack.c.l.b16 %v232
        %v662 = vunpack.c.h.b16 %v232
        %v663 = vunpack.c.l.b16 %v233
        %v664 = vunpack.c.h.b16 %v233
        %v665 = vunpack.c.l.b16 %v234
        %v666 = vunpack.c.h.b16 %v234
        %v667 = vunpack.c.l.b16 %v235
        %v668 = vunpack.c.h.b16 %v235
        %v669 = vunpack.c.l.b16 %v236
        %v670 = vunpack.c.h.b16 %v236
        %v671 = vunpack.c.l.b16 %v237
        %v672 = vunpack.c.h.b16 %v237
        %v673 = vunpack.c.l.b16 %v238
        %v674 = vunpack.c.h.b16 %v238
        %v675 = vunpack.c.l.b16 %v239
        %v676 = vunpack.c.h.b16 %v239
        %v677 = vunpack.c.l.b16 %v240
        %v678 = vunpack.c.h.b16 %v240
        %v679 = vunpack.c.l.b16 %v241
        %v680 = vunpack.c.h.b16 %v241
        %v681 = vunpack.c.l.b16 %v242
        %v682 = vunpack.c.h.b16 %v242
        %v683 = vunpack.c.l.b16 %v243
        %v684 = vunpack.c.h.b16 %v243
        %v685 = vunpack.c.l.b16 %v244
        %v686 = vunpack.c.h.b16 %v244
        %v687 = vunpack.c.l.b16 %v245
        %v688 = vunpack.c.h.b16 %v245
        %v689 = vunpack.c.l.b16 %v246
        %v690 = vunpack.c.h.b16 %v246
        %v691 = vunpack.c.l.b16 %v247
        %v692 = vunpack.c.h.b16 %v247
        %v693 = vunpack.c.l.b16 %v248
        %v694 = vunpack.c.h.b16 %v248
        %v695 = vunpack.c.l.b16 %v249
        %v696 = vunpack.c.h.b16 %v249
        %v697 = vunpack.c.l.b16 %v250
        %v698 = vunpack.c.h.b16 %v250
        %v699 = vunpack.c.l.b16 %v251
        %v700 = vunpack.c.h.b16 %v251
        %v701 = vunpack.c.l.b16 %v252
        %v702 = vunpack.c.h.b16 %v252
        %v703 = vunpack.c.l.b16 %v253
        %v704 = vunpack.c.h.b16 %v253
        %v705 = vunpack.c.l.b16 %v254
        %v706 = vunpack.c.h.b16 %v254
        %v707 = vunpack.c.l.b16 %v255
        %v708 = vunpack.c.h.b16 %v255
        %v709 = vunpack.c.l.b16 %v256
        %v710 = vunpack.c.h.b16 %v256
        %v711 = vunpack.c.l.b16 %v257
        %v712 = vunpack.c.h.b16 %v257
        %v713 = vunpack.c.l.b16 %v258
        %v714 = vunpack.c.h.b16 %v258
        %v715 = vunpack.c.l.b16 %v259
        %v716 = vunpack.c.h.b16 %v259
        %v717 = vunpack.c.l.b16 %v260
        %v718 = vunpack.c.h.b16 %v260
        %v719 = vunpack.c.l.b16 %v261
        %v720 = vunpack.c.h.b16 %v261
        %v721 = vunpack.c.l.b16 %v262
        %v722 = vunpack.c.h.b16 %v262
        %v723 = vunpack.c.l.b16 %v263
        %v724 = vunpack.c.h.b16 %v263
        %v725 = vunpack.c.l.b16 %v264
        %v726 = vunpack.c.h.b16 %v264
        %v727 = vunpack.c.l.b16 %v265
        %v728 = vunpack.c.h.b16 %v265
        %v729 = vunpack.c.l.b16 %v266
        %v730 = vunpack.c.h.b16 %v266
        %v731 = vunpack.c.l.b16 %v267
        %v732 = vunpack.c.h.b16 %v267
        %v733 = vunpack.c.l.b16 %v268
        %v734 = vunpack.c.h.b16 %v268
        %v735 = vunpack.c.l.b16 %v269
        %v736 = vunpack.c.h.b16 %v269
        %v737 = vunpack.c.l.b16 %v270
        %v738 = vunpack.c.h.b16 %v270
        %v739 = vunpack.c.l.b16 %v271
        %v740 = vunpack.c.h.b16 %v271
        %v741 = vunpack.c.l.b16 %v272
        %v742 = vunpack.c.h.b16 %v272
        %v743 = vunpack.c.l.b16 %v273
        %v744 = vunpack.c.h.b16 %v273
        %v745 = vunpack.c.l.b16 %v274
        %v746 = vunpack.c.h.b16 %v274
        %v747 = vunpack.c.l.b16 %v275
        %v748 = vunpack.c.h.b16 %v275
        %v749 = vunpack.c.l.b16 %v276
        %v750 = vunpack.c.h.b16 %v276
        %v751 = vunpack.c.l.b16 %v277
        %v752 = vunpack.c.h.b16 %v277
        %v753 = vunpack.c.l.b16 %v278
        %v754 = vunpack.c.h.b16 %v278
        %v755 = vunpack.c.l.b16 %v279
        %v756 = vunpack.c.h.b16 %v279
        %v757 = vunpack.c.l.b16 %v280
        %v758 = vunpack.c.h.b16 %v280
        %v759 = vunpack.c.l.b16 %v281
        %v760 = vunpack.c.h.b16 %v281
        %v761 = vunpack.c.l.b16 %v282
        %v762 = vunpack.c.h.b16 %v282
        %v763 = vunpack.c.l.b16 %v283
        %v764 = vunpack.c.h.b16 %v283
        %v765 = vunpack.c.l.b16 %v284
        %v766 = vunpack.c.h.b16 %v284
        %v767 = vunpack.c.l.b16 %v285
        %v768 = vunpack.c.h.b16 %v285
        %v769 = vunpack.c.l.b16 %v286
        %v770 = vunpack.c.h.b16 %v286
        %v771 = vunpack.c.l.b16 %v287
        %v772 = vunpack.c.h.b16 %v287
        %v773 = vunpack.c.l.b16 %v288
        %v774 = vunpack.c.h.b16 %v288
        %v775 = vunpack.c.l.b16 %v289
        %v776 = vunpack.c.h.b16 %v289
        %v777 = vunpack.c.l.b16 %v290
        %v778 = vunpack.c.h.b16 %v290
        %v779 = vunpack.c.l.b16 %v291
        %v780 = vunpack.c.h.b16 %v291
        %v781 = vunpack.c.l.b16 %v292
        %v782 = vunpack.c.h.b16 %v292
        %v783 = vunpack.c.l.b16 %v293
        %v784 = vunpack.c.h.b16 %v293
        %v785 = vunpack.c.l.b16 %v294
        %v786 = vunpack.c.h.b16 %v294
        %v787 = vunpack.c.l.b16 %v295
        %v788 = vunpack.c.h.b16 %v295
        %v789 = vunpack.c.l.b16 %v296
        %v790 = vunpack.c.h.b16 %v296
        %v791 = vunpack.c.l.b16 %v297
        %v792 = vunpack.c.h.b16 %v297
        %v793 = vunpack.c.l.b16 %v298
        %v794 = vunpack.c.h.b16 %v298
        %v795 = vunpack.c.l.b16 %v299
        %v796 = vunpack.c.h.b16 %v299
        %v797 = vunpack.c.l.b16 %v300
        %v798 = vunpack.c.h.b16 %v300
        %v799 = vunpack.c.l.b16 %v301
        %v800 = vunpack.c.h.b16 %v301
        %v801 = vunpack.c.l.b16 %v302
        %v802 = vunpack.c.h.b16 %v302
        %v803 = vunpack.c.l.b16 %v303
        %v804 = vunpack.c.h.b16 %v303
        %v805 = vunpack.c.l.b16 %v304
        %v806 = vunpack.c.h.b16 %v304
        %v807 = vunpack.c.l.b16 %v305
        %v808 = vunpack.c.h.b16 %v305
        %v809 = vunpack.c.l.b16 %v306
        %v810 = vunpack.c.h.b16 %v306
        %v811 = vunpack.c.l.b16 %v307
        %v812 = vunpack.c.h.b16 %v307
        %v813 = vunpack.c.l.b16 %v308
        %v814 = vunpack.c.h.b16 %v308
        %v815 = vunpack.c.l.b16 %v309
        %v816 = vunpack.c.h.b16 %v309
        %v817 = vunpack.c.l.b16 %v310
        %v818 = vunpack.c.h.b16 %v310
        %v819 = vpack.c.b16 %v651, %v643
        %v820 = vpack.c.b16 %v652, %v644
        %v821 = vpack.c.b16 %v653, %v645
        %v822 = vpack.c.b16 %v654, %v646
        %v823 = vpack.c.b16 %v655, %v647
        %v824 = vpack.c.b16 %v656, %v648
        %v825 = vpack.c.b16 %v657, %v649
        %v826 = vpack.c.b16 %v658, %v650
        %v827 = vpack.c.b16 %v667, %v659
        %v828 = vpack.c.b16 %v668, %v660
        %v829 = vpack.c.b16 %v669, %v661
        %v830 = vpack.c.b16 %v670, %v662
        %v831 = vpack.c.b16 %v671, %v663
        %v832 = vpack.c.b16 %v672, %v664
        %v833 = vpack.c.b16 %v673, %v665
        %v834 = vpack.c.b16 %v674, %v666
        %v835 = vpack.c.b16 %v683, %v675
        %v836 = vpack.c.b16 %v684, %v676
        %v837 = vpack.c.b16 %v685, %v677
        %v838 = vpack.c.b16 %v686, %v678
        %v839 = vpack.c.b16 %v687, %v679
        %v840 = vpack.c.b16 %v688, %v680
        %v841 = vpack.c.b16 %v689, %v681
        %v842 = vpack.c.b16 %v690, %v682
        %v843 = vpack.c.b16 %v699, %v691
        %v844 = vpack.c.b16 %v700, %v692
        %v845 = vpack.c.b16 %v701, %v693
        %v846 = vpack.c.b16 %v702, %v694
        %v847 = vpack.c.b16 %v703, %v695
        %v848 = vpack.c.b16 %v704, %v696
        %v849 = vpack.c.b16 %v705, %v697
        %v850 = vpack.c.b16 %v706, %v698
        %v851 = vpack.c.b16 %v715, %v707
        %v852 = vpack.c.b16 %v716, %v708
        %v853 = vpack.c.b16 %v717, %v709
        %v854 = vpack.c.b16 %v718, %v710
        %v855 = vpack.c.b16 %v719, %v711
        %v856 = vpack.c.b16 %v720, %v712
        %v857 = vpack.c.b16 %v721, %v713
        %v858 = vpack.c.b16 %v722, %v714
        %v859 = vpack.c.b16 %v731, %v723
        %v860 = vpack.c.b16 %v732, %v724
        %v861 = vpack.c.b16 %v733, %v725
        %v862 = vpack.c.b16 %v734, %v726
        %v863 = vpack.c.b16 %v735, %v727
        %v864 = vpack.c.b16 %v736, %v728
        %v865 = vpack.c.b16 %v737, %v729
        %v866 = vpack.c.b16 %v738, %v730
        %v867 = vpack.c.b16 %v747, %v739
        %v868 = vpack.c.b16 %v748, %v740
        %v869 = vpack.c.b16 %v749, %v741
        %v870 = vpack.c.b16 %v750, %v742
        %v871 = vpack.c.b16 %v751, %v743
        %v872 = vpack.c.b16 %v752, %v744
        %v873 = vpack.c.b16 %v753, %v745
        %v874 = vpack.c.b16 %v754, %v746
        %v875 = vpack.c.b16 %v763, %v755
        %v876 = vpack.c.b16 %v764, %v756
        %v877 = vpack.c.b16 %v765, %v757
        %v878 = vpack.c.b16 %v766, %v758
        %v879 = vpack.c.b16 %v767, %v759
        %v880 = vpack.c.b16 %v768, %v760
        %v881 = vpack.c.b16 %v769, %v761
        %v882 = vpack.c.b16 %v770, %v762
        %v883 = vpack.c.b16 %v779, %v771
        %v884 = vpack.c.b16 %v780, %v772
        %v885 = vpack.c.b16 %v781, %v773
        %v886 = vpack.c.b16 %v782, %v774
        %v887 = vpack.c.b16 %v783, %v775
        %v888 = vpack.c.b16 %v784, %v776
        %v889 = vpack.c.b16 %v785, %v777
        %v890 = vpack.c.b16 %v786, %v778
        %v891 = vpack.c.b16 %v795, %v787
        %v892 = vpack.c.b16 %v796, %v788
        %v893 = vpack.c.b16 %v797, %v789
        %v894 = vpack.c.b16 %v798, %v790
        %v895 = vpack.c.b16 %v799, %v791
        %v896 = vpack.c.b16 %v800, %v792
        %v897 = vpack.c.b16 %v801, %v793
        %v898 = vpack.c.b16 %v802, %v794
        %v899 = vpack.c.b16 %v811, %v803
        %v900 = vpack.c.b16 %v812, %v804
        %v901 = vpack.c.b16 %v813, %v805
        %v902 = vpack.c.b16 %v814, %v806
        %v903 = vpack.c.b16 %v815, %v807
        %v904 = vpack.c.b16 %v816, %v808
        %v905 = vpack.c.b16 %v817, %v809
        %v906 = vpack.c.b16 %v818, %v810
        %v1228 = vunpack.c.l.b16 %v311
        %v1229 = vunpack.c.h.b16 %v311
        %v1230 = vunpack.c.l.b16 %v312
        %v1231 = vunpack.c.h.b16 %v312
        %v1232 = vunpack.c.l.b16 %v313
        %v1233 = vunpack.c.h.b16 %v313
        %v1234 = vunpack.c.l.b16 %v314
        %v1235 = vunpack.c.h.b16 %v314
        %v1236 = vunpack.c.l.b16 %v315
        %v1237 = vunpack.c.h.b16 %v315
        %v1238 = vunpack.c.l.b16 %v316
        %v1239 = vunpack.c.h.b16 %v316
        %v1240 = vunpack.c.l.b16 %v317
        %v1241 = vunpack.c.h.b16 %v317
        %v1242 = vunpack.c.l.b16 %v318
        %v1243 = vunpack.c.h.b16 %v318
        %v1244 = vunpack.c.l.b16 %v319
        %v1245 = vunpack.c.h.b16 %v319
        %v1246 = vunpack.c.l.b16 %v320
        %v1247 = vunpack.c.h.b16 %v320
        %v1248 = vunpack.c.l.b16 %v321
        %v1249 = vunpack.c.h.b16 %v321
        %v1250 = vunpack.c.l.b16 %v322
        %v1251 = vunpack.c.h.b16 %v322
        %v1252 = vunpack.c.l.b16 %v323
        %v1253 = vunpack.c.h.b16 %v323
        %v1254 = vunpack.c.l.b16 %v324
        %v1255 = vunpack.c.h.b16 %v324
        %v1256 = vunpack.c.l.b16 %v325
        %v1257 = vunpack.c.h.b16 %v325
        %v1258 = vunpack.c.l.b16 %v326
        %v1259 = vunpack.c.h.b16 %v326
        %v1260 = vunpack.c.l.b16 %v327
        %v1261 = vunpack.c.h.b16 %v327
        %v1262 = vunpack.c.l.b16 %v328
        %v1263 = vunpack.c.h.b16 %v328
        %v1264 = vunpack.c.l.b16 %v329
        %v1265 = vunpack.c.h.b16 %v329
        %v1266 = vunpack.c.l.b16 %v330
        %v1267 = vunpack.c.h.b16 %v330
        %v1268 = vunpack.c.l.b16 %v331
        %v1269 = vunpack.c.h.b16 %v331
        %v1270 = vunpack.c.l.b16 %v332
        %v1271 = vunpack.c.h.b16 %v332
        %v1272 = vunpack.c.l.b16 %v333
        %v1273 = vunpack.c.h.b16 %v333
        %v1274 = vunpack.c.l.b16 %v334
        %v1275 = vunpack.c.h.b16 %v334
        %v1276 = vunpack.c.l.b16 %v335
        %v1277 = vunpack.c.h.b16 %v335
        %v1278 = vunpack.c.l.b16 %v336
        %v1279 = vunpack.c.h.b16 %v336
        %v1280 = vunpack.c.l.b16 %v337
        %v1281 = vunpack.c.h.b16 %v337
        %v1282 = vunpack.c.l.b16 %v338
        %v1283 = vunpack.c.h.b16 %v338
        %v1284 = vunpack.c.l.b16 %v339
        %v1285 = vunpack.c.h.b16 %v339
        %v1286 = vunpack.c.l.b16 %v340
        %v1287 = vunpack.c.h.b16 %v340
        %v1288 = vunpack.c.l.b16 %v341
        %v1289 = vunpack.c.h.b16 %v341
        %v1290 = vunpack.c.l.b16 %v342
        %v1291 = vunpack.c.h.b16 %v342
        %v1292 = vunpack.c.l.b16 %v343
        %v1293 = vunpack.c.h.b16 %v343
        %v1294 = vunpack.c.l.b16 %v344
        %v1295 = vunpack.c.h.b16 %v344
        %v1296 = vunpack.c.l.b16 %v345
        %v1297 = vunpack.c.h.b16 %v345
        %v1298 = vunpack.c.l.b16 %v346
        %v1299 = vunpack.c.h.b16 %v346
        %v1300 = vunpack.c.l.b16 %v347
        %v1301 = vunpack.c.h.b16 %v347
        %v1302 = vunpack.c.l.b16 %v348
        %v1303 = vunpack.c.h.b16 %v348
        %v1304 = vunpack.c.l.b16 %v349
        %v1305 = vunpack.c.h.b16 %v349
        %v1306 = vunpack.c.l.b16 %v350
        %v1307 = vunpack.c.h.b16 %v350
        %v1308 = vunpack.c.l.b16 %v351
        %v1309 = vunpack.c.h.b16 %v351
        %v1310 = vunpack.c.l.b16 %v352
        %v1311 = vunpack.c.h.b16 %v352
        %v1312 = vunpack.c.l.b16 %v353
        %v1313 = vunpack.c.h.b16 %v353
        %v1314 = vunpack.c.l.b16 %v354
        %v1315 = vunpack.c.h.b16 %v354
        %v1316 = vunpack.c.l.b16 %v355
        %v1317 = vunpack.c.h.b16 %v355
        %v1318 = vunpack.c.l.b16 %v356
        %v1319 = vunpack.c.h.b16 %v356
        %v1320 = vunpack.c.l.b16 %v357
        %v1321 = vunpack.c.h.b16 %v357
        %v1322 = vunpack.c.l.b16 %v358
        %v1323 = vunpack.c.h.b16 %v358
        %v1324 = vunpack.c.l.b16 %v359
        %v1325 = vunpack.c.h.b16 %v359
        %v1326 = vunpack.c.l.b16 %v360
        %v1327 = vunpack.c.h.b16 %v360
        %v1328 = vunpack.c.l.b16 %v361
        %v1329 = vunpack.c.h.b16 %v361
        %v1330 = vunpack.c.l.b16 %v362
        %v1331 = vunpack.c.h.b16 %v362
        %v1332 = vunpack.c.l.b16 %v363
        %v1333 = vunpack.c.h.b16 %v363
        %v1334 = vunpack.c.l.b16 %v364
        %v1335 = vunpack.c.h.b16 %v364
        %v1336 = vunpack.c.l.b16 %v365
        %v1337 = vunpack.c.h.b16 %v365
        %v1338 = vunpack.c.l.b16 %v366
        %v1339 = vunpack.c.h.b16 %v366
        %v1340 = vunpack.c.l.b16 %v367
        %v1341 = vunpack.c.h.b16 %v367
        %v1342 = vunpack.c.l.b16 %v368
        %v1343 = vunpack.c.h.b16 %v368
        %v1344 = vunpack.c.l.b16 %v369
        %v1345 = vunpack.c.h.b16 %v369
        %v1346 = vunpack.c.l.b16 %v370
        %v1347 = vunpack.c.h.b16 %v370
        %v1348 = vunpack.c.l.b16 %v371
        %v1349 = vunpack.c.h.b16 %v371
        %v1350 = vunpack.c.l.b16 %v372
        %v1351 = vunpack.c.h.b16 %v372
        %v1352 = vunpack.c.l.b16 %v373
        %v1353 = vunpack.c.h.b16 %v373
        %v1354 = vunpack.c.l.b16 %v374
        %v1355 = vunpack.c.h.b16 %v374
        %v1356 = vunpack.c.l.b16 %v375
        %v1357 = vunpack.c.h.b16 %v375
        %v1358 = vunpack.c.l.b16 %v376
        %v1359 = vunpack.c.h.b16 %v376
        %v1360 = vunpack.c.l.b16 %v377
        %v1361 = vunpack.c.h.b16 %v377
        %v1362 = vunpack.c.l.b16 %v378
        %v1363 = vunpack.c.h.b16 %v378
        %v1364 = vunpack.c.l.b16 %v379
        %v1365 = vunpack.c.h.b16 %v379
        %v1366 = vunpack.c.l.b16 %v380
        %v1367 = vunpack.c.h.b16 %v380
        %v1368 = vunpack.c.l.b16 %v381
        %v1369 = vunpack.c.h.b16 %v381
        %v1370 = vunpack.c.l.b16 %v382
        %v1371 = vunpack.c.h.b16 %v382
        %v1372 = vunpack.c.l.b16 %v383
        %v1373 = vunpack.c.h.b16 %v383
        %v1374 = vunpack.c.l.b16 %v384
        %v1375 = vunpack.c.h.b16 %v384
        %v1376 = vunpack.c.l.b16 %v385
        %v1377 = vunpack.c.h.b16 %v385
        %v1378 = vunpack.c.l.b16 %v386
        %v1379 = vunpack.c.h.b16 %v386
        %v1380 = vunpack.c.l.b16 %v387
        %v1381 = vunpack.c.h.b16 %v387
        %v1382 = vunpack.c.l.b16 %v388
        %v1383 = vunpack.c.h.b16 %v388
        %v1384 = vunpack.c.l.b16 %v389
        %v1385 = vunpack.c.h.b16 %v389
        %v1386 = vunpack.c.l.b16 %v390
        %v1387 = vunpack.c.h.b16 %v390
        %v1388 = vunpack.c.l.b16 %v391
        %v1389 = vunpack.c.h.b16 %v391
        %v1390 = vunpack.c.l.b16 %v392
        %v1391 = vunpack.c.h.b16 %v392
        %v1392 = vunpack.c.l.b16 %v393
        %v1393 = vunpack.c.h.b16 %v393
        %v1394 = vunpack.c.l.b16 %v394
        %v1395 = vunpack.c.h.b16 %v394
        %v1396 = vunpack.c.l.b16 %v395
        %v1397 = vunpack.c.h.b16 %v395
        %v1398 = vunpack.c.l.b16 %v396
        %v1399 = vunpack.c.h.b16 %v396
        %v1400 = vunpack.c.l.b16 %v397
        %v1401 = vunpack.c.h.b16 %v397
        %v1402 = vunpack.c.l.b16 %v398
        %v1403 = vunpack.c.h.b16 %v398
        %v1404 = vunpack.c.l.b16 %v399
        %v1405 = vunpack.c.h.b16 %v399
        %v1406 = vunpack.c.l.b16 %v400
        %v1407 = vunpack.c.h.b16 %v400
        %v1408 = vunpack.c.l.b16 %v401
        %v1409 = vunpack.c.h.b16 %v401
        %v1410 = vunpack.c.l.b16 %v402
        %v1411 = vunpack.c.h.b16 %v402
        %v1412 = vunpack.c.l.b16 %v403
        %v1413 = vunpack.c.h.b16 %v403
        %v1414 = vunpack.c.l.b16 %v404
        %v1415 = vunpack.c.h.b16 %v404
        %v1416 = vunpack.c.l.b16 %v405
        %v1417 = vunpack.c.h.b16 %v405
        %v1418 = vunpack.c.l.b16 %v406
        %v1419 = vunpack.c.h.b16 %v406
        %v1420 = vunpack.c.l.b16 %v407
        %v1421 = vunpack.c.h.b16 %v407
        %v1422 = vunpack.c.l.b16 %v408
        %v1423 = vunpack.c.h.b16 %v408
        %v1424 = vunpack.c.l.b16 %v409
        %v1425 = vunpack.c.h.b16 %v409
        %v1426 = vunpack.c.l.b16 %v410
        %v1427 = vunpack.c.h.b16 %v410
        %v1428 = vunpack.c.l.b16 %v411
        %v1429 = vunpack.c.h.b16 %v411
        %v1430 = vunpack.c.l.b16 %v412
        %v1431 = vunpack.c.h.b16 %v412
        %v1432 = vunpack.c.l.b16 %v413
        %v1433 = vunpack.c.h.b16 %v413
        %v1434 = vunpack.c.l.b16 %v414
        %v1435 = vunpack.c.h.b16 %v414
        %v1436 = vunpack.c.l.b16 %v415
        %v1437 = vunpack.c.h.b16 %v415
        %v1438 = vunpack.c.l.b16 %v416
        %v1439 = vunpack.c.h.b16 %v416
        %v1440 = vunpack.c.l.b16 %v417
        %v1441 = vunpack.c.h.b16 %v417
        %v1442 = vunpack.c.l.b16 %v418
        %v1443 = vunpack.c.h.b16 %v418
        %v1444 = vunpack.c.l.b16 %v419
        %v1445 = vunpack.c.h.b16 %v419
        %v1446 = vunpack.c.l.b16 %v420
        %v1447 = vunpack.c.h.b16 %v420
        %v1448 = vunpack.c.l.b16 %v421
        %v1449 = vunpack.c.h.b16 %v421
        %v1450 = vunpack.c.l.b16 %v422
        %v1451 = vunpack.c.h.b16 %v422
        %v1452 = vunpack.c.l.b16 %v423
        %v1453 = vunpack.c.h.b16 %v423
        %v1454 = vunpack.c.l.b16 %v424
        %v1455 = vunpack.c.h.b16 %v424
        %v1456 = vunpack.c.l.b16 %v425
        %v1457 = vunpack.c.h.b16 %v425
        %v1458 = vunpack.c.l.b16 %v426
        %v1459 = vunpack.c.h.b16 %v426
        %v1460 = vunpack.c.l.b16 %v427
        %v1461 = vunpack.c.h.b16 %v427
        %v1462 = vunpack.c.l.b16 %v428
        %v1463 = vunpack.c.h.b16 %v428
        %v1464 = vunpack.c.l.b16 %v429
        %v1465 = vunpack.c.h.b16 %v429
        %v1466 = vunpack.c.l.b16 %v430
        %v1467 = vunpack.c.h.b16 %v430
        %v1468 = vunpack.c.l.b16 %v431
        %v1469 = vunpack.c.h.b16 %v431
        %v1470 = vunpack.c.l.b16 %v432
        %v1471 = vunpack.c.h.b16 %v432
        %v1472 = vunpack.c.l.b16 %v433
        %v1473 = vunpack.c.h.b16 %v433
        %v1474 = vunpack.c.l.b16 %v434
        %v1475 = vunpack.c.h.b16 %v434
        %v1476 = vunpack.c.l.b16 %v435
        %v1477 = vunpack.c.h.b16 %v435
        %v1478 = vunpack.c.l.b16 %v436
        %v1479 = vunpack.c.h.b16 %v436
        %v1480 = vunpack.c.l.b16 %v437
        %v1481 = vunpack.c.h.b16 %v437
        %v1482 = vunpack.c.l.b16 %v438
        %v1483 = vunpack.c.h.b16 %v438
        %v1484 = vunpack.c.l.b16 %v439
        %v1485 = vunpack.c.h.b16 %v439
        %v1486 = vunpack.c.l.b16 %v440
        %v1487 = vunpack.c.h.b16 %v440
        %v1488 = vunpack.c.l.b16 %v441
        %v1489 = vunpack.c.h.b16 %v441
        %v1490 = vunpack.c.l.b16 %v442
        %v1491 = vunpack.c.h.b16 %v442
        %v1492 = vunpack.c.l.b16 %v443
        %v1493 = vunpack.c.h.b16 %v443
        %v1494 = vunpack.c.l.b16 %v444
        %v1495 = vunpack.c.h.b16 %v444
        %v1496 = vunpack.c.l.b16 %v445
        %v1497 = vunpack.c.h.b16 %v445
        %v1498 = vunpack.c.l.b16 %v446
        %v1499 = vunpack.c.h.b16 %v446
        %v1500 = vunpack.c.l.b16 %v447
        %v1501 = vunpack.c.h.b16 %v447
        %v1502 = vunpack.c.l.b16 %v448
        %v1503 = vunpack.c.h.b16 %v448
        %v1504 = vunpack.c.l.b16 %v449
        %v1505 = vunpack.c.h.b16 %v449
        %v1506 = vunpack.c.l.b16 %v450
        %v1507 = vunpack.c.h.b16 %v450
        %v1508 = vunpack.c.l.b16 %v451
        %v1509 = vunpack.c.h.b16 %v451
        %v1510 = vunpack.c.l.b16 %v452
        %v1511 = vunpack.c.h.b16 %v452
        %v1512 = vunpack.c.l.b16 %v453
        %v1513 = vunpack.c.h.b16 %v453
        %v1514 = vunpack.c.l.b16 %v454
        %v1515 = vunpack.c.h.b16 %v454
        %v1516 = vunpack.c.l.b16 %v455
        %v1517 = vunpack.c.h.b16 %v455
        %v1518 = vunpack.c.l.b16 %v456
        %v1519 = vunpack.c.h.b16 %v456
        %v1520 = vunpack.c.l.b16 %v457
        %v1521 = vunpack.c.h.b16 %v457
        %v1522 = vunpack.c.l.b16 %v458
        %v1523 = vunpack.c.h.b16 %v458
        %v1524 = vunpack.c.l.b16 %v459
        %v1525 = vunpack.c.h.b16 %v459
        %v1526 = vunpack.c.l.b16 %v460
        %v1527 = vunpack.c.h.b16 %v460
        %v1528 = vunpack.c.l.b16 %v461
        %v1529 = vunpack.c.h.b16 %v461
        %v1530 = vunpack.c.l.b16 %v462
        %v1531 = vunpack.c.h.b16 %v462
        %v1532 = vunpack.c.l.b16 %v463
        %v1533 = vunpack.c.h.b16 %v463
        %v1534 = vunpack.c.l.b16 %v464
        %v1535 = vunpack.c.h.b16 %v464
        %v1536 = vunpack.c.l.b16 %v465
        %v1537 = vunpack.c.h.b16 %v465
        %v1538 = vunpack.c.l.b16 %v466
        %v1539 = vunpack.c.h.b16 %v466
        %v1540 = vunpack.c.l.b16 %v467
        %v1541 = vunpack.c.h.b16 %v467
        %v1542 = vunpack.c.l.b16 %v468
        %v1543 = vunpack.c.h.b16 %v468
        %v1544 = vunpack.c.l.b16 %v469
        %v1545 = vunpack.c.h.b16 %v469
        %v1546 = vunpack.c.l.b16 %v470
        %v1547 = vunpack.c.h.b16 %v470
        %v1548 = vunpack.c.l.b16 %v471
        %v1549 = vunpack.c.h.b16 %v471
        %v1550 = vunpack.c.l.b16 %v472
        %v1551 = vunpack.c.h.b16 %v472
        %v1552 = vunpack.c.l.b16 %v473
        %v1553 = vunpack.c.h.b16 %v473
        %v1554 = vunpack.c.l.b16 %v474
        %v1555 = vunpack.c.h.b16 %v474
        %v1556 = vunpack.c.l.b16 %v475
        %v1557 = vunpack.c.h.b16 %v475
        %v1558 = vunpack.c.l.b16 %v476
        %v1559 = vunpack.c.h.b16 %v476
        %v1560 = vunpack.c.l.b16 %v477
        %v1561 = vunpack.c.h.b16 %v477
        %v1562 = vunpack.c.l.b16 %v478
        %v1563 = vunpack.c.h.b16 %v478
        %v1564 = vunpack.c.l.b16 %v479
        %v1565 = vunpack.c.h.b16 %v479
        %v1566 = vunpack.c.l.b16 %v480
        %v1567 = vunpack.c.h.b16 %v480
        %v1568 = vunpack.c.l.b16 %v481
        %v1569 = vunpack.c.h.b16 %v481
        %v1570 = vunpack.c.l.b16 %v482
        %v1571 = vunpack.c.h.b16 %v482
        %v1572 = vunpack.c.l.b16 %v483
        %v1573 = vunpack.c.h.b16 %v483
        %v1574 = vunpack.c.l.b16 %v484
        %v1575 = vunpack.c.h.b16 %v484
        %v1576 = vunpack.c.l.b16 %v485
        %v1577 = vunpack.c.h.b16 %v485
        %v1578 = vunpack.c.l.b16 %v486
        %v1579 = vunpack.c.h.b16 %v486
        %v1580 = vunpack.c.l.b16 %v487
        %v1581 = vunpack.c.h.b16 %v487
        %v1582 = vunpack.c.l.b16 %v488
        %v1583 = vunpack.c.h.b16 %v488
        %v1584 = vunpack.c.l.b16 %v489
        %v1585 = vunpack.c.h.b16 %v489
        %v1586 = vunpack.c.l.b16 %v490
        %v1587 = vunpack.c.h.b16 %v490
        %v1588 = vunpack.c.l.b16 %v491
        %v1589 = vunpack.c.h.b16 %v491
        %v1590 = vunpack.c.l.b16 %v492
        %v1591 = vunpack.c.h.b16 %v492
        %v1592 = vunpack.c.l.b16 %v493
        %v1593 = vunpack.c.h.b16 %v493
        %v1594 = vunpack.c.l.b16 %v494
        %v1595 = vunpack.c.h.b16 %v494
        %v1596 = vunpack.c.l.b16 %v495
        %v1597 = vunpack.c.h.b16 %v495
        %v1598 = vunpack.c.l.b16 %v496
        %v1599 = vunpack.c.h.b16 %v496
        %v1600 = vunpack.c.l.b16 %v497
        %v1601 = vunpack.c.h.b16 %v497
        %v1602 = vunpack.c.l.b16 %v498
        %v1603 = vunpack.c.h.b16 %v498
        %v1604 = vunpack.c.l.b16 %v499
        %v1605 = vunpack.c.h.b16 %v499
        %v1606 = vunpack.c.l.b16 %v500
        %v1607 = vunpack.c.h.b16 %v500
        %v1608 = vunpack.c.l.b16 %v501
        %v1609 = vunpack.c.h.b16 %v501
        %v1610 = vunpack.c.l.b16 %v502
        %v1611 = vunpack.c.h.b16 %v502
        %v1612 = vunpack.c.l.b16 %v503
        %v1613 = vunpack.c.h.b16 %v503
        %v1614 = vunpack.c.l.b16 %v504
        %v1615 = vunpack.c.h.b16 %v504
        %v1616 = vunpack.c.l.b16 %v505
        %v1617 = vunpack.c.h.b16 %v505
        %v1618 = vunpack.c.l.b16 %v506
        %v1619 = vunpack.c.h.b16 %v506
        %v1620 = vunpack.c.l.b16 %v507
        %v1621 = vunpack.c.h.b16 %v507
        %v1622 = vunpack.c.l.b16 %v508
        %v1623 = vunpack.c.h.b16 %v508
        %v1624 = vunpack.c.l.b16 %v509
        %v1625 = vunpack.c.h.b16 %v509
        %v1626 = vunpack.c.l.b16 %v510
        %v1627 = vunpack.c.h.b16 %v510
        %v1628 = vunpack.c.l.b16 %v511
        %v1629 = vunpack.c.h.b16 %v511
        %v1630 = vunpack.c.l.b16 %v512
        %v1631 = vunpack.c.h.b16 %v512
        %v1632 = vunpack.c.l.b16 %v513
        %v1633 = vunpack.c.h.b16 %v513
        %v1634 = vunpack.c.l.b16 %v514
        %v1635 = vunpack.c.h.b16 %v514
        %v1636 = vunpack.c.l.b16 %v515
        %v1637 = vunpack.c.h.b16 %v515
        %v1638 = vunpack.c.l.b16 %v516
        %v1639 = vunpack.c.h.b16 %v516
        %v1640 = vunpack.c.l.b16 %v517
        %v1641 = vunpack.c.h.b16 %v517
        %v1642 = vunpack.c.l.b16 %v518
        %v1643 = vunpack.c.h.b16 %v518
        %v1644 = vunpack.c.l.b16 %v519
        %v1645 = vunpack.c.h.b16 %v519
        %v1646 = vunpack.c.l.b16 %v520
        %v1647 = vunpack.c.h.b16 %v520
        %v1648 = vunpack.c.l.b16 %v521
        %v1649 = vunpack.c.h.b16 %v521
        %v1650 = vunpack.c.l.b16 %v522
        %v1651 = vunpack.c.h.b16 %v522
        %v1652 = vunpack.c.l.b16 %v523
        %v1653 = vunpack.c.h.b16 %v523
        %v1654 = vunpack.c.l.b16 %v524
        %v1655 = vunpack.c.h.b16 %v524
        %v1656 = vunpack.c.l.b16 %v525
        %v1657 = vunpack.c.h.b16 %v525
        %v1658 = vunpack.c.l.b16 %v526
        %v1659 = vunpack.c.h.b16 %v526
        %v1660 = vunpack.c.l.b16 %v527
        %v1661 = vunpack.c.h.b16 %v527
        %v1662 = vunpack.c.l.b16 %v528
        %v1663 = vunpack.c.h.b16 %v528
        %v1664 = vunpack.c.l.b16 %v529
        %v1665 = vunpack.c.h.b16 %v529
        %v1666 = vunpack.c.l.b16 %v530
        %v1667 = vunpack.c.h.b16 %v530
        %v1668 = vunpack.c.l.b16 %v531
        %v1669 = vunpack.c.h.b16 %v531
        %v1670 = vunpack.c.l.b16 %v532
        %v1671 = vunpack.c.h.b16 %v532
        %v1672 = vunpack.c.l.b16 %v533
        %v1673 = vunpack.c.h.b16 %v533
        %v1674 = vunpack.c.l.b16 %v534
        %v1675 = vunpack.c.h.b16 %v534
        %v1676 = vunpack.c.l.b16 %v535
        %v1677 = vunpack.c.h.b16 %v535
        %v1678 = vunpack.c.l.b16 %v536
        %v1679 = vunpack.c.h.b16 %v536
        %v1680 = vunpack.c.l.b16 %v537
        %v1681 = vunpack.c.h.b16 %v537
        %v1682 = vunpack.c.l.b16 %v538
        %v1683 = vunpack.c.h.b16 %v538
        %v1684 = vunpack.c.l.b16 %v539
        %v1685 = vunpack.c.h.b16 %v539
        %v1686 = vunpack.c.l.b16 %v540
        %v1687 = vunpack.c.h.b16 %v540
        %v1688 = vunpack.c.l.b16 %v541
        %v1689 = vunpack.c.h.b16 %v541
        %v1690 = vunpack.c.l.b16 %v542
        %v1691 = vunpack.c.h.b16 %v542
        %v1692 = vunpack.c.l.b16 %v543
        %v1693 = vunpack.c.h.b16 %v543
        %v1694 = vunpack.c.l.b16 %v544
        %v1695 = vunpack.c.h.b16 %v544
        %v1696 = vunpack.c.l.b16 %v545
        %v1697 = vunpack.c.h.b16 %v545
        %v1698 = vunpack.c.l.b16 %v546
        %v1699 = vunpack.c.h.b16 %v546
        %v1700 = vunpack.c.l.b16 %v547
        %v1701 = vunpack.c.h.b16 %v547
        %v1702 = vunpack.c.l.b16 %v548
        %v1703 = vunpack.c.h.b16 %v548
        %v1704 = vunpack.c.l.b16 %v549
        %v1705 = vunpack.c.h.b16 %v549
        %v1706 = vunpack.c.l.b16 %v550
        %v1707 = vunpack.c.h.b16 %v550
        %v1708 = vunpack.c.l.b16 %v551
        %v1709 = vunpack.c.h.b16 %v551
        %v1710 = vunpack.c.l.b16 %v552
        %v1711 = vunpack.c.h.b16 %v552
        %v1712 = vunpack.c.l.b16 %v553
        %v1713 = vunpack.c.h.b16 %v553
        %v1714 = vunpack.c.l.b16 %v554
        %v1715 = vunpack.c.h.b16 %v554
        %v1716 = vpack.c.b16 %v1232, %v1228
        %v1717 = vpack.c.b16 %v1233, %v1229
        %v1718 = vpack.c.b16 %v1234, %v1230
        %v1719 = vpack.c.b16 %v1235, %v1231
        %v1720 = vpack.c.b16 %v1240, %v1236
        %v1721 = vpack.c.b16 %v1241, %v1237
        %v1722 = vpack.c.b16 %v1242, %v1238
        %v1723 = vpack.c.b16 %v1243, %v1239
        %v1724 = vpack.c.b16 %v1248, %v1244
        %v1725 = vpack.c.b16 %v1249, %v1245
        %v1726 = vpack.c.b16 %v1250, %v1246
        %v1727 = vpack.c.b16 %v1251, %v1247
        %v1728 = vpack.c.b16 %v1256, %v1252
        %v1729 = vpack.c.b16 %v1257, %v1253
        %v1730 = vpack.c.b16 %v1258, %v1254
        %v1731 = vpack.c.b16 %v1259, %v1255
        %v1732 = vpack.c.b16 %v1264, %v1260
        %v1733 = vpack.c.b16 %v1265, %v1261
        %v1734 = vpack.c.b16 %v1266, %v1262
        %v1735 = vpack.c.b16 %v1267, %v1263
        %v1736 = vpack.c.b16 %v1272, %v1268
        %v1737 = vpack.c.b16 %v1273, %v1269
        %v1738 = vpack.c.b16 %v1274, %v1270
        %v1739 = vpack.c.b16 %v1275, %v1271
        %v1740 = vpack.c.b16 %v1280, %v1276
        %v1741 = vpack.c.b16 %v1281, %v1277
        %v1742 = vpack.c.b16 %v1282, %v1278
        %v1743 = vpack.c.b16 %v1283, %v1279
        %v1744 = vpack.c.b16 %v1288, %v1284
        %v1745 = vpack.c.b16 %v1289, %v1285
        %v1746 = vpack.c.b16 %v1290, %v1286
        %v1747 = vpack.c.b16 %v1291, %v1287
        %v1748 = vpack.c.b16 %v1296, %v1292
        %v1749 = vpack.c.b16 %v1297, %v1293
        %v1750 = vpack.c.b16 %v1298, %v1294
        %v1751 = vpack.c.b16 %v1299, %v1295
        %v1752 = vpack.c.b16 %v1304, %v1300
        %v1753 = vpack.c.b16 %v1305, %v1301
        %v1754 = vpack.c.b16 %v1306, %v1302
        %v1755 = vpack.c.b16 %v1307, %v1303
        %v1756 = vpack.c.b16 %v1312, %v1308
        %v1757 = vpack.c.b16 %v1313, %v1309
        %v1758 = vpack.c.b16 %v1314, %v1310
        %v1759 = vpack.c.b16 %v1315, %v1311
        %v1760 = vpack.c.b16 %v1320, %v1316
        %v1761 = vpack.c.b16 %v1321, %v1317
        %v1762 = vpack.c.b16 %v1322, %v1318
        %v1763 = vpack.c.b16 %v1323, %v1319
        %v1764 = vpack.c.b16 %v1328, %v1324
        %v1765 = vpack.c.b16 %v1329, %v1325
        %v1766 = vpack.c.b16 %v1330, %v1326
        %v1767 = vpack.c.b16 %v1331, %v1327
        %v1768 = vpack.c.b16 %v1336, %v1332
        %v1769 = vpack.c.b16 %v1337, %v1333
        %v1770 = vpack.c.b16 %v1338, %v1334
        %v1771 = vpack.c.b16 %v1339, %v1335
        %v1772 = vpack.c.b16 %v1344, %v1340
        %v1773 = vpack.c.b16 %v1345, %v1341
        %v1774 = vpack.c.b16 %v1346, %v1342
        %v1775 = vpack.c.b16 %v1347, %v1343
        %v1776 = vpack.c.b16 %v1352, %v1348
        %v1777 = vpack.c.b16 %v1353, %v1349
        %v1778 = vpack.c.b16 %v1354, %v1350
        %v1779 = vpack.c.b16 %v1355, %v1351
        %v1780 = vpack.c.b16 %v1360, %v1356
        %v1781 = vpack.c.b16 %v1361, %v1357
        %v1782 = vpack.c.b16 %v1362, %v1358
        %v1783 = vpack.c.b16 %v1363, %v1359
        %v1784 = vpack.c.b16 %v1368, %v1364
        %v1785 = vpack.c.b16 %v1369, %v1365
        %v1786 = vpack.c.b16 %v1370, %v1366
        %v1787 = vpack.c.b16 %v1371, %v1367
        %v1788 = vpack.c.b16 %v1376, %v1372
        %v1789 = vpack.c.b16 %v1377, %v1373
        %v1790 = vpack.c.b16 %v1378, %v1374
        %v1791 = vpack.c.b16 %v1379, %v1375
        %v1792 = vpack.c.b16 %v1384, %v1380
        %v1793 = vpack.c.b16 %v1385, %v1381
        %v1794 = vpack.c.b16 %v1386, %v1382
        %v1795 = vpack.c.b16 %v1387, %v1383
        %v1796 = vpack.c.b16 %v1392, %v1388
        %v1797 = vpack.c.b16 %v1393, %v1389
        %v1798 = vpack.c.b16 %v1394, %v1390
        %v1799 = vpack.c.b16 %v1395, %v1391
        %v1800 = vpack.c.b16 %v1400, %v1396
        %v1801 = vpack.c.b16 %v1401, %v1397
        %v1802 = vpack.c.b16 %v1402, %v1398
        %v1803 = vpack.c.b16 %v1403, %v1399
        %v1804 = vpack.c.b16 %v1408, %v1404
        %v1805 = vpack.c.b16 %v1409, %v1405
        %v1806 = vpack.c.b16 %v1410, %v1406
        %v1807 = vpack.c.b16 %v1411, %v1407
        %v1808 = vpack.c.b16 %v1416, %v1412
        %v1809 = vpack.c.b16 %v1417, %v1413
        %v1810 = vpack.c.b16 %v1418, %v1414
        %v1811 = vpack.c.b16 %v1419, %v1415
        %v1812 = vpack.c.b16 %v1424, %v1420
        %v1813 = vpack.c.b16 %v1425, %v1421
        %v1814 = vpack.c.b16 %v1426, %v1422
        %v1815 = vpack.c.b16 %v1427, %v1423
        %v1816 = vpack.c.b16 %v1432, %v1428
        %v1817 = vpack.c.b16 %v1433, %v1429
        %v1818 = vpack.c.b16 %v1434, %v1430
        %v1819 = vpack.c.b16 %v1435, %v1431
        %v1820 = vpack.c.b16 %v1440, %v1436
        %v1821 = vpack.c.b16 %v1441, %v1437
        %v1822 = vpack.c.b16 %v1442, %v1438
        %v1823 = vpack.c.b16 %v1443, %v1439
        %v1824 = vpack.c.b16 %v1448, %v1444
        %v1825 = vpack.c.b16 %v1449, %v1445
        %v1826 = vpack.c.b16 %v1450, %v1446
        %v1827 = vpack.c.b16 %v1451, %v1447
        %v1828 = vpack.c.b16 %v1456, %v1452
        %v1829 = vpack.c.b16 %v1457, %v1453
        %v1830 = vpack.c.b16 %v1458, %v1454
        %v1831 = vpack.c.b16 %v1459, %v1455
        %v1832 = vpack.c.b16 %v1464, %v1460
        %v1833 = vpack.c.b16 %v1465, %v1461
        %v1834 = vpack.c.b16 %v1466, %v1462
        %v1835 = vpack.c.b16 %v1467, %v1463
        %v1836 = vpack.c.b16 %v1472, %v1468
        %v1837 = vpack.c.b16 %v1473, %v1469
        %v1838 = vpack.c.b16 %v1474, %v1470
        %v1839 = vpack.c.b16 %v1475, %v1471
        %v1840 = vpack.c.b16 %v1480, %v1476
        %v1841 = vpack.c.b16 %v1481, %v1477
        %v1842 = vpack.c.b16 %v1482, %v1478
        %v1843 = vpack.c.b16 %v1483, %v1479
        %v1844 = vpack.c.b16 %v1488, %v1484
        %v1845 = vpack.c.b16 %v1489, %v1485
        %v1846 = vpack.c.b16 %v1490, %v1486
        %v1847 = vpack.c.b16 %v1491, %v1487
        %v1848 = vpack.c.b16 %v1496, %v1492
        %v1849 = vpack.c.b16 %v1497, %v1493
        %v1850 = vpack.c.b16 %v1498, %v1494
        %v1851 = vpack.c.b16 %v1499, %v1495
        %v1852 = vpack.c.b16 %v1504, %v1500
        %v1853 = vpack.c.b16 %v1505, %v1501
        %v1854 = vpack.c.b16 %v1506, %v1502
        %v1855 = vpack.c.b16 %v1507, %v1503
        %v1856 = vpack.c.b16 %v1512, %v1508
        %v1857 = vpack.c.b16 %v1513, %v1509
        %v1858 = vpack.c.b16 %v1514, %v1510
        %v1859 = vpack.c.b16 %v1515, %v1511
        %v1860 = vpack.c.b16 %v1520, %v1516
        %v1861 = vpack.c.b16 %v1521, %v1517
        %v1862 = vpack.c.b16 %v1522, %v1518
        %v1863 = vpack.c.b16 %v1523, %v1519
        %v1864 = vpack.c.b16 %v1528, %v1524
        %v1865 = vpack.c.b16 %v1529, %v1525
        %v1866 = vpack.c.b16 %v1530, %v1526
        %v1867 = vpack.c.b16 %v1531, %v1527
        %v1868 = vpack.c.b16 %v1536, %v1532
        %v1869 = vpack.c.b16 %v1537, %v1533
        %v1870 = vpack.c.b16 %v1538, %v1534
        %v1871 = vpack.c.b16 %v1539, %v1535
        %v1872 = vpack.c.b16 %v1544, %v1540
        %v1873 = vpack.c.b16 %v1545, %v1541
        %v1874 = vpack.c.b16 %v1546, %v1542
        %v1875 = vpack.c.b16 %v1547, %v1543
        %v1876 = vpack.c.b16 %v1552, %v1548
        %v1877 = vpack.c.b16 %v1553, %v1549
        %v1878 = vpack.c.b16 %v1554, %v1550
        %v1879 = vpack.c.b16 %v1555, %v1551
        %v1880 = vpack.c.b16 %v1560, %v1556
        %v1881 = vpack.c.b16 %v1561, %v1557
        %v1882 = vpack.c.b16 %v1562, %v1558
        %v1883 = vpack.c.b16 %v1563, %v1559
        %v1884 = vpack.c.b16 %v1568, %v1564
        %v1885 = vpack.c.b16 %v1569, %v1565
        %v1886 = vpack.c.b16 %v1570, %v1566
        %v1887 = vpack.c.b16 %v1571, %v1567
        %v1888 = vpack.c.b16 %v1576, %v1572
        %v1889 = vpack.c.b16 %v1577, %v1573
        %v1890 = vpack.c.b16 %v1578, %v1574
        %v1891 = vpack.c.b16 %v1579, %v1575
        %v1892 = vpack.c.b16 %v1584, %v1580
        %v1893 = vpack.c.b16 %v1585, %v1581
        %v1894 = vpack.c.b16 %v1586, %v1582
        %v1895 = vpack.c.b16 %v1587, %v1583
        %v1896 = vpack.c.b16 %v1592, %v1588
        %v1897 = vpack.c.b16 %v1593, %v1589
        %v1898 = vpack.c.b16 %v1594, %v1590
        %v1899 = vpack.c.b16 %v1595, %v1591
        %v1900 = vpack.c.b16 %v1600, %v1596
        %v1901 = vpack.c.b16 %v1601, %v1597
        %v1902 = vpack.c.b16 %v1602, %v1598
        %v1903 = vpack.c.b16 %v1603, %v1599
        %v1904 = vpack.c.b16 %v1608, %v1604
        %v1905 = vpack.c.b16 %v1609, %v1605
        %v1906 = vpack.c.b16 %v1610, %v1606
        %v1907 = vpack.c.b16 %v1611, %v1607
        %v1908 = vpack.c.b16 %v1616, %v1612
        %v1909 = vpack.c.b16 %v1617, %v1613
        %v1910 = vpack.c.b16 %v1618, %v1614
        %v1911 = vpack.c.b16 %v1619, %v1615
        %v1912 = vpack.c.b16 %v1624, %v1620
        %v1913 = vpack.c.b16 %v1625, %v1621
        %v1914 = vpack.c.b16 %v1626, %v1622
        %v1915 = vpack.c.b16 %v1627, %v1623
        %v1916 = vpack.c.b16 %v1632, %v1628
        %v1917 = vpack.c.b16 %v1633, %v1629
        %v1918 = vpack.c.b16 %v1634, %v1630
        %v1919 = vpack.c.b16 %v1635, %v1631
        %v1920 = vpack.c.b16 %v1640, %v1636
        %v1921 = vpack.c.b16 %v1641, %v1637
        %v1922 = vpack.c.b16 %v1642, %v1638
        %v1923 = vpack.c.b16 %v1643, %v1639
        %v1924 = vpack.c.b16 %v1648, %v1644
        %v1925 = vpack.c.b16 %v1649, %v1645
        %v1926 = vpack.c.b16 %v1650, %v1646
        %v1927 = vpack.c.b16 %v1651, %v1647
        %v1928 = vpack.c.b16 %v1656, %v1652
        %v1929 = vpack.c.b16 %v1657, %v1653
        %v1930 = vpack.c.b16 %v1658, %v1654
        %v1931 = vpack.c.b16 %v1659, %v1655
        %v1932 = vpack.c.b16 %v1664, %v1660
        %v1933 = vpack.c.b16 %v1665, %v1661
        %v1934 = vpack.c.b16 %v1666, %v1662
        %v1935 = vpack.c.b16 %v1667, %v1663
        %v1936 = vpack.c.b16 %v1672, %v1668
        %v1937 = vpack.c.b16 %v1673, %v1669
        %v1938 = vpack.c.b16 %v1674, %v1670
        %v1939 = vpack.c.b16 %v1675, %v1671
        %v1940 = vpack.c.b16 %v1680, %v1676
        %v1941 = vpack.c.b16 %v1681, %v1677
        %v1942 = vpack.c.b16 %v1682, %v1678
        %v1943 = vpack.c.b16 %v1683, %v1679
        %v1944 = vpack.c.b16 %v1688, %v1684
        %v1945 = vpack.c.b16 %v1689, %v1685
        %v1946 = vpack.c.b16 %v1690, %v1686
        %v1947 = vpack.c.b16 %v1691, %v1687
        %v1948 = vpack.c.b16 %v1696, %v1692
        %v1949 = vpack.c.b16 %v1697, %v1693
        %v1950 = vpack.c.b16 %v1698, %v1694
        %v1951 = vpack.c.b16 %v1699, %v1695
        %v1952 = vpack.c.b16 %v1704, %v1700
        %v1953 = vpack.c.b16 %v1705, %v1701
        %v1954 = vpack.c.b16 %v1706, %v1702
        %v1955 = vpack.c.b16 %v1707, %v1703
        %v1956 = vpack.c.b16 %v1712, %v1708
        %v1957 = vpack.c.b16 %v1713, %v1709
        %v1958 = vpack.c.b16 %v1714, %v1710
        %v1959 = vpack.c.b16 %v1715, %v1711
        %vm2204 = vcmask 654336
        %v2206 = vsel %vm2204, %v826, 0
        %v2209 = vsel %vm2204, %v834, 0
        %v2212 = vsel %vm2204, %v842, 0
        %v2215 = vsel %vm2204, %v850, 0
        %v2218 = vsel %vm2204, %v858, 0
        %v2221 = vsel %vm2204, %v866, 0
        %v2224 = vsel %vm2204, %v874, 0
        %v2227 = vsel %vm2204, %v882, 0
        %v2230 = vsel %vm2204, %v890, 0
        %v2233 = vsel %vm2204, %v898, 0
        %v2236 = vsel %vm2204, %v906, 0
        %2238 = vmatprep.subr.bf16.mxu0 %v1717
        %2239 = vmatpush1.bf16.msra.mxu0 %v1716
        %2240 = vmatprep.subr.bf16.mxu0 %v1721
        %2241 = vmatpush1.bf16.msra.mxu0 %v1720
        %2242 = vmatprep.subr.bf16.mxu0 %v1725
        %2243 = vmatpush1.bf16.msra.mxu0 %v1724
        %2244 = vmatprep.subr.bf16.mxu0 %v1729
        %2245 = vmatpush1.bf16.msra.mxu0 %v1728
        %2246 = vmatprep.subr.bf16.mxu0 %v1733
        %2247 = vmatpush1.bf16.msra.mxu0 %v1732
        %2248 = vmatprep.subr.bf16.mxu0 %v1737
        %2249 = vmatpush1.bf16.msra.mxu0 %v1736
        %2250 = vmatprep.subr.bf16.mxu0 %v1741
        %2251 = vmatpush1.bf16.msra.mxu0 %v1740
        %2252 = vmatprep.subr.bf16.mxu0 %v1745
        %2253 = vmatpush1.bf16.msra.mxu0 %v1744
        %2254 = vmatprep.subr.bf16.mxu0 %v1749
        %2255 = vmatpush1.bf16.msra.mxu0 %v1748
        %2256 = vmatprep.subr.bf16.mxu0 %v1753
        %2257 = vmatpush1.bf16.msra.mxu0 %v1752
        %2258 = vmatprep.subr.bf16.mxu0 %v1757
        %2259 = vmatpush1.bf16.msra.mxu0 %v1756
        %2260 = vmatprep.subr.bf16.mxu0 %v1761
        %2261 = vmatpush1.bf16.msra.mxu0 %v1760
        %2262 = vmatprep.subr.bf16.mxu0 %v1765
        %2263 = vmatpush1.bf16.msra.mxu0 %v1764
        %2264 = vmatprep.subr.bf16.mxu0 %v1769
        %2265 = vmatpush1.bf16.msra.mxu0 %v1768
        %2266 = vmatprep.subr.bf16.mxu0 %v1773
        %2267 = vmatpush1.bf16.msra.mxu0 %v1772
        %2268 = vmatprep.subr.bf16.mxu0 %v1777
        %2269 = vmatpush1.bf16.msra.mxu0 %v1776
        %2270 = vmatprep.mubr.bf16.mxu0 %v820
        %2271 = vmatmul.mubr.bf16.gmra.mrb[0].mxu0 %v819
        %v2272 = vpop.f32.mrb[0].mxu0
        %v2273 = vadd.f32 0.0, %v2272
        %v2274 = vpop.f32.mrb[0].mxu0
        %v2275 = vadd.f32 0.0, %v2274
        %v2276 = vpop.f32.mrb[0].mxu0
        %v2277 = vadd.f32 0.0, %v2276
        %v2278 = vpop.f32.mrb[0].mxu0
        %v2279 = vadd.f32 0.0, %v2278
        %2280 = vmatprep.mubr.bf16.mxu0 %v828
        %2281 = vmatmul.mubr.bf16.gmra.mrb[0].mxu0 %v827
        %v2282 = vpop.f32.mrb[0].mxu0
        %v2283 = vadd.f32 0.0, %v2282
        %v2284 = vpop.f32.mrb[0].mxu0
        %v2285 = vadd.f32 0.0, %v2284
        %v2286 = vpop.f32.mrb[0].mxu0
        %v2287 = vadd.f32 0.0, %v2286
        %v2288 = vpop.f32.mrb[0].mxu0
        %v2289 = vadd.f32 0.0, %v2288
        %2290 = vmatprep.mubr.bf16.mxu0 %v836
        %2291 = vmatmul.mubr.bf16.gmra.mrb[0].mxu0 %v835
        %v2292 = vpop.f32.mrb[0].mxu0
        %v2293 = vadd.f32 0.0, %v2292
        %v2294 = vpop.f32.mrb[0].mxu0
        %v2295 = vadd.f32 0.0, %v2294
        %v2296 = vpop.f32.mrb[0].mxu0
        %v2297 = vadd.f32 0.0, %v2296
        %v2298 = vpop.f32.mrb[0].mxu0
        %v2299 = vadd.f32 0.0, %v2298
        %2300 = vmatprep.mubr.bf16.mxu0 %v844
        %2301 = vmatmul.mubr.bf16.gmra.mrb[0].mxu0 %v843
        %v2302 = vpop.f32.mrb[0].mxu0
        %v2303 = vadd.f32 0.0, %v2302
        %v2304 = vpop.f32.mrb[0].mxu0
        %v2305 = vadd.f32 0.0, %v2304
        %v2306 = vpop.f32.mrb[0].mxu0
        %v2307 = vadd.f32 0.0, %v2306
        %v2308 = vpop.f32.mrb[0].mxu0
        %v2309 = vadd.f32 0.0, %v2308
        %2310 = vmatprep.mubr.bf16.mxu0 %v852
        %2311 = vmatmul.mubr.bf16.gmra.mrb[0].mxu0 %v851
        %v2312 = vpop.f32.mrb[0].mxu0
        %v2313 = vadd.f32 0.0, %v2312
        %v2314 = vpop.f32.mrb[0].mxu0
        %v2315 = vadd.f32 0.0, %v2314
        %v2316 = vpop.f32.mrb[0].mxu0
        %v2317 = vadd.f32 0.0, %v2316
        %v2318 = vpop.f32.mrb[0].mxu0
        %v2319 = vadd.f32 0.0, %v2318
        %2320 = vmatprep.mubr.bf16.mxu0 %v860
        %2321 = vmatmul.mubr.bf16.gmra.mrb[0].mxu0 %v859
        %v2322 = vpop.f32.mrb[0].mxu0
        %v2323 = vadd.f32 0.0, %v2322
        %v2324 = vpop.f32.mrb[0].mxu0
        %v2325 = vadd.f32 0.0, %v2324
        %v2326 = vpop.f32.mrb[0].mxu0
        %v2327 = vadd.f32 0.0, %v2326
        %v2328 = vpop.f32.mrb[0].mxu0
        %v2329 = vadd.f32 0.0, %v2328
        %2330 = vmatprep.mubr.bf16.mxu0 %v868
        %2331 = vmatmul.mubr.bf16.gmra.mrb[0].mxu0 %v867
        %v2332 = vpop.f32.mrb[0].mxu0
        %v2333 = vadd.f32 0.0, %v2332
        %v2334 = vpop.f32.mrb[0].mxu0
        %v2335 = vadd.f32 0.0, %v2334
        %v2336 = vpop.f32.mrb[0].mxu0
        %v2337 = vadd.f32 0.0, %v2336
        %v2338 = vpop.f32.mrb[0].mxu0
        %v2339 = vadd.f32 0.0, %v2338
        %2340 = vmatprep.mubr.bf16.mxu0 %v876
        %2341 = vmatmul.mubr.bf16.gmra.mrb[0].mxu0 %v875
        %v2342 = vpop.f32.mrb[0].mxu0
        %v2343 = vadd.f32 0.0, %v2342
        %v2344 = vpop.f32.mrb[0].mxu0
        %v2345 = vadd.f32 0.0, %v2344
        %v2346 = vpop.f32.mrb[0].mxu0
        %v2347 = vadd.f32 0.0, %v2346
        %v2348 = vpop.f32.mrb[0].mxu0
        %v2349 = vadd.f32 0.0, %v2348
        %2350 = vmatprep.mubr.bf16.mxu0 %v884
        %2351 = vmatmul.mubr.bf16.gmra.mrb[0].mxu0 %v883
        %v2352 = vpop.f32.mrb[0].mxu0
        %v2353 = vadd.f32 0.0, %v2352
        %v2354 = vpop.f32.mrb[0].mxu0
        %v2355 = vadd.f32 0.0, %v2354
        %v2356 = vpop.f32.mrb[0].mxu0
        %v2357 = vadd.f32 0.0, %v2356
        %v2358 = vpop.f32.mrb[0].mxu0
        %v2359 = vadd.f32 0.0, %v2358
        %2360 = vmatprep.mubr.bf16.mxu0 %v892
        %2361 = vmatmul.mubr.bf16.gmra.mrb[0].mxu0 %v891
        %v2362 = vpop.f32.mrb[0].mxu0
        %v2363 = vadd.f32 0.0, %v2362
        %v2364 = vpop.f32.mrb[0].mxu0
        %v2365 = vadd.f32 0.0, %v2364
        %v2366 = vpop.f32.mrb[0].mxu0
        %v2367 = vadd.f32 0.0, %v2366
        %v2368 = vpop.f32.mrb[0].mxu0
        %v2369 = vadd.f32 0.0, %v2368
        %2370 = vmatprep.mubr.bf16.mxu0 %v900
        %2371 = vmatmul.mubr.bf16.gmra.mrb[0].mxu0 %v899
        %v2372 = vpop.f32.mrb[0].mxu0
        %v2373 = vadd.f32 0.0, %v2372
        %v2374 = vpop.f32.mrb[0].mxu0
        %v2375 = vadd.f32 0.0, %v2374
        %v2376 = vpop.f32.mrb[0].mxu0
        %v2377 = vpop.f32.mrb[0].mxu0
        %2378 = vdwg.mxu0
        %2379 = vmatprep.subr.bf16.mxu0 %v1781
        %2380 = vmatpush1.bf16.msra.mxu0 %v1780
        %2381 = vmatprep.subr.bf16.mxu0 %v1785
        %2382 = vmatpush1.bf16.msra.mxu0 %v1784
        %2383 = vmatprep.subr.bf16.mxu0 %v1789
        %2384 = vmatpush1.bf16.msra.mxu0 %v1788
        %2385 = vmatprep.subr.bf16.mxu0 %v1793
        %2386 = vmatpush1.bf16.msra.mxu0 %v1792
        %2387 = vmatprep.subr.bf16.mxu0 %v1797
        %2388 = vmatpush1.bf16.msra.mxu0 %v1796
        %2389 = vmatprep.subr.bf16.mxu0 %v1801
        %2390 = vmatpush1.bf16.msra.mxu0 %v1800
        %2391 = vmatprep.subr.bf16.mxu0 %v1805
        %2392 = vmatpush1.bf16.msra.mxu0 %v1804
        %2393 = vmatprep.subr.bf16.mxu0 %v1809
        %2394 = vmatpush1.bf16.msra.mxu0 %v1808
        %2395 = vmatprep.subr.bf16.mxu0 %v1813
        %2396 = vmatpush1.bf16.msra.mxu0 %v1812
        %2397 = vmatprep.subr.bf16.mxu0 %v1817
        %2398 = vmatpush1.bf16.msra.mxu0 %v1816
        %2399 = vmatprep.subr.bf16.mxu0 %v1821
        %2400 = vmatpush1.bf16.msra.mxu0 %v1820
        %2401 = vmatprep.subr.bf16.mxu0 %v1825
        %2402 = vmatpush1.bf16.msra.mxu0 %v1824
        %2403 = vmatprep.subr.bf16.mxu0 %v1829
        %2404 = vmatpush1.bf16.msra.mxu0 %v1828
        %2405 = vmatprep.subr.bf16.mxu0 %v1833
        %2406 = vmatpush1.bf16.msra.mxu0 %v1832
        %2407 = vmatprep.subr.bf16.mxu0 %v1837
        %2408 = vmatpush1.bf16.msra.mxu0 %v1836
        %2409 = vmatprep.subr.bf16.mxu0 %v1841
        %2410 = vmatpush1.bf16.msra.mxu0 %v1840
        %2411 = vmatprep.mubr.bf16.mxu0 %v822
        %2412 = vmatmul.mubr.bf16.gmra.mrb[0].mxu0 %v821
        %v2413 = vpop.f32.mrb[0].mxu0
        %v2414 = vadd.f32 %v2273, %v2413
        %v2415 = vpop.f32.mrb[0].mxu0
        %v2416 = vadd.f32 %v2275, %v2415
        %v2417 = vpop.f32.mrb[0].mxu0
        %v2418 = vadd.f32 %v2277, %v2417
        %v2419 = vpop.f32.mrb[0].mxu0
        %v2420 = vadd.f32 %v2279, %v2419
        %2421 = vmatprep.mubr.bf16.mxu0 %v830
        %2422 = vmatmul.mubr.bf16.gmra.mrb[0].mxu0 %v829
        %v2423 = vpop.f32.mrb[0].mxu0
        %v2424 = vadd.f32 %v2283, %v2423
        %v2425 = vpop.f32.mrb[0].mxu0
        %v2426 = vadd.f32 %v2285, %v2425
        %v2427 = vpop.f32.mrb[0].mxu0
        %v2428 = vadd.f32 %v2287, %v2427
        %v2429 = vpop.f32.mrb[0].mxu0
        %v2430 = vadd.f32 %v2289, %v2429
        %2431 = vmatprep.mubr.bf16.mxu0 %v838
        %2432 = vmatmul.mubr.bf16.gmra.mrb[0].mxu0 %v837
        %v2433 = vpop.f32.mrb[0].mxu0
        %v2434 = vadd.f32 %v2293, %v2433
        %v2435 = vpop.f32.mrb[0].mxu0
        %v2436 = vadd.f32 %v2295, %v2435
        %v2437 = vpop.f32.mrb[0].mxu0
        %v2438 = vadd.f32 %v2297, %v2437
        %v2439 = vpop.f32.mrb[0].mxu0
        %v2440 = vadd.f32 %v2299, %v2439
        %2441 = vmatprep.mubr.bf16.mxu0 %v846
        %2442 = vmatmul.mubr.bf16.gmra.mrb[0].mxu0 %v845
        %v2443 = vpop.f32.mrb[0].mxu0
        %v2444 = vadd.f32 %v2303, %v2443
        %v2445 = vpop.f32.mrb[0].mxu0
        %v2446 = vadd.f32 %v2305, %v2445
        %v2447 = vpop.f32.mrb[0].mxu0
        %v2448 = vadd.f32 %v2307, %v2447
        %v2449 = vpop.f32.mrb[0].mxu0
        %v2450 = vadd.f32 %v2309, %v2449
        %2451 = vmatprep.mubr.bf16.mxu0 %v854
        %2452 = vmatmul.mubr.bf16.gmra.mrb[0].mxu0 %v853
        %v2453 = vpop.f32.mrb[0].mxu0
        %v2454 = vadd.f32 %v2313, %v2453
        %v2455 = vpop.f32.mrb[0].mxu0
        %v2456 = vadd.f32 %v2315, %v2455
        %v2457 = vpop.f32.mrb[0].mxu0
        %v2458 = vadd.f32 %v2317, %v2457
        %v2459 = vpop.f32.mrb[0].mxu0
        %v2460 = vadd.f32 %v2319, %v2459
        %2461 = vmatprep.mubr.bf16.mxu0 %v862
        %2462 = vmatmul.mubr.bf16.gmra.mrb[0].mxu0 %v861
        %v2463 = vpop.f32.mrb[0].mxu0
        %v2464 = vadd.f32 %v2323, %v2463
        %v2465 = vpop.f32.mrb[0].mxu0
        %v2466 = vadd.f32 %v2325, %v2465
        %v2467 = vpop.f32.mrb[0].mxu0
        %v2468 = vadd.f32 %v2327, %v2467
        %v2469 = vpop.f32.mrb[0].mxu0
        %v2470 = vadd.f32 %v2329, %v2469
        %2471 = vmatprep.mubr.bf16.mxu0 %v870
        %2472 = vmatmul.mubr.bf16.gmra.mrb[0].mxu0 %v869
        %v2473 = vpop.f32.mrb[0].mxu0
        %v2474 = vadd.f32 %v2333, %v2473
        %v2475 = vpop.f32.mrb[0].mxu0
        %v2476 = vadd.f32 %v2335, %v2475
        %v2477 = vpop.f32.mrb[0].mxu0
        %v2478 = vadd.f32 %v2337, %v2477
        %v2479 = vpop.f32.mrb[0].mxu0
        %v2480 = vadd.f32 %v2339, %v2479
        %2481 = vmatprep.mubr.bf16.mxu0 %v878
        %2482 = vmatmul.mubr.bf16.gmra.mrb[0].mxu0 %v877
        %v2483 = vpop.f32.mrb[0].mxu0
        %v2484 = vadd.f32 %v2343, %v2483
        %v2485 = vpop.f32.mrb[0].mxu0
        %v2486 = vadd.f32 %v2345, %v2485
        %v2487 = vpop.f32.mrb[0].mxu0
        %v2488 = vadd.f32 %v2347, %v2487
        %v2489 = vpop.f32.mrb[0].mxu0
        %v2490 = vadd.f32 %v2349, %v2489
        %2491 = vmatprep.mubr.bf16.mxu0 %v886
        %2492 = vmatmul.mubr.bf16.gmra.mrb[0].mxu0 %v885
        %v2493 = vpop.f32.mrb[0].mxu0
        %v2494 = vadd.f32 %v2353, %v2493
        %v2495 = vpop.f32.mrb[0].mxu0
        %v2496 = vadd.f32 %v2355, %v2495
        %v2497 = vpop.f32.mrb[0].mxu0
        %v2498 = vadd.f32 %v2357, %v2497
        %v2499 = vpop.f32.mrb[0].mxu0
        %v2500 = vadd.f32 %v2359, %v2499
        %2501 = vmatprep.mubr.bf16.mxu0 %v894
        %2502 = vmatmul.mubr.bf16.gmra.mrb[0].mxu0 %v893
        %v2503 = vpop.f32.mrb[0].mxu0
        %v2504 = vadd.f32 %v2363, %v2503
        %v2505 = vpop.f32.mrb[0].mxu0
        %v2506 = vadd.f32 %v2365, %v2505
        %v2507 = vpop.f32.mrb[0].mxu0
        %v2508 = vadd.f32 %v2367, %v2507
        %v2509 = vpop.f32.mrb[0].mxu0
        %v2510 = vadd.f32 %v2369, %v2509
        %2511 = vmatprep.mubr.bf16.mxu0 %v902
        %2512 = vmatmul.mubr.bf16.gmra.mrb[0].mxu0 %v901
        %v2513 = vpop.f32.mrb[0].mxu0
        %v2514 = vadd.f32 %v2373, %v2513
        %v2515 = vpop.f32.mrb[0].mxu0
        %v2516 = vadd.f32 %v2375, %v2515
        %v2517 = vpop.f32.mrb[0].mxu0
        %v2518 = vpop.f32.mrb[0].mxu0
        %2519 = vdwg.mxu0
        %2520 = vmatprep.subr.bf16.mxu0 %v1845
        %2521 = vmatpush1.bf16.msra.mxu0 %v1844
        %2522 = vmatprep.subr.bf16.mxu0 %v1849
        %2523 = vmatpush1.bf16.msra.mxu0 %v1848
        %2524 = vmatprep.subr.bf16.mxu0 %v1853
        %2525 = vmatpush1.bf16.msra.mxu0 %v1852
        %2526 = vmatprep.subr.bf16.mxu0 %v1857
        %2527 = vmatpush1.bf16.msra.mxu0 %v1856
        %2528 = vmatprep.subr.bf16.mxu0 %v1861
        %2529 = vmatpush1.bf16.msra.mxu0 %v1860
        %2530 = vmatprep.subr.bf16.mxu0 %v1865
        %2531 = vmatpush1.bf16.msra.mxu0 %v1864
        %2532 = vmatprep.subr.bf16.mxu0 %v1869
        %2533 = vmatpush1.bf16.msra.mxu0 %v1868
        %2534 = vmatprep.subr.bf16.mxu0 %v1873
        %2535 = vmatpush1.bf16.msra.mxu0 %v1872
        %2536 = vmatprep.subr.bf16.mxu0 %v1877
        %2537 = vmatpush1.bf16.msra.mxu0 %v1876
        %2538 = vmatprep.subr.bf16.mxu0 %v1881
        %2539 = vmatpush1.bf16.msra.mxu0 %v1880
        %2540 = vmatprep.subr.bf16.mxu0 %v1885
        %2541 = vmatpush1.bf16.msra.mxu0 %v1884
        %2542 = vmatprep.subr.bf16.mxu0 %v1889
        %2543 = vmatpush1.bf16.msra.mxu0 %v1888
        %2544 = vmatprep.subr.bf16.mxu0 %v1893
        %2545 = vmatpush1.bf16.msra.mxu0 %v1892
        %2546 = vmatprep.subr.bf16.mxu0 %v1897
        %2547 = vmatpush1.bf16.msra.mxu0 %v1896
        %2548 = vmatprep.subr.bf16.mxu0 %v1901
        %2549 = vmatpush1.bf16.msra.mxu0 %v1900
        %2550 = vmatprep.subr.bf16.mxu0 %v1905
        %2551 = vmatpush1.bf16.msra.mxu0 %v1904
        %2552 = vmatprep.mubr.bf16.mxu0 %v824
        %2553 = vmatmul.mubr.bf16.gmra.mrb[0].mxu0 %v823
        %v2554 = vpop.f32.mrb[0].mxu0
        %v2555 = vadd.f32 %v2414, %v2554
        %v2556 = vpop.f32.mrb[0].mxu0
        %v2557 = vadd.f32 %v2416, %v2556
        %v2558 = vpop.f32.mrb[0].mxu0
        %v2559 = vadd.f32 %v2418, %v2558
        %v2560 = vpop.f32.mrb[0].mxu0
        %v2561 = vadd.f32 %v2420, %v2560
        %2562 = vmatprep.mubr.bf16.mxu0 %v832
        %2563 = vmatmul.mubr.bf16.gmra.mrb[0].mxu0 %v831
        %v2564 = vpop.f32.mrb[0].mxu0
        %v2565 = vadd.f32 %v2424, %v2564
        %v2566 = vpop.f32.mrb[0].mxu0
        %v2567 = vadd.f32 %v2426, %v2566
        %v2568 = vpop.f32.mrb[0].mxu0
        %v2569 = vadd.f32 %v2428, %v2568
        %v2570 = vpop.f32.mrb[0].mxu0
        %v2571 = vadd.f32 %v2430, %v2570
        %2572 = vmatprep.mubr.bf16.mxu0 %v840
        %2573 = vmatmul.mubr.bf16.gmra.mrb[0].mxu0 %v839
        %v2574 = vpop.f32.mrb[0].mxu0
        %v2575 = vadd.f32 %v2434, %v2574
        %v2576 = vpop.f32.mrb[0].mxu0
        %v2577 = vadd.f32 %v2436, %v2576
        %v2578 = vpop.f32.mrb[0].mxu0
        %v2579 = vadd.f32 %v2438, %v2578
        %v2580 = vpop.f32.mrb[0].mxu0
        %v2581 = vadd.f32 %v2440, %v2580
        %2582 = vmatprep.mubr.bf16.mxu0 %v848
        %2583 = vmatmul.mubr.bf16.gmra.mrb[0].mxu0 %v847
        %v2584 = vpop.f32.mrb[0].mxu0
        %v2585 = vadd.f32 %v2444, %v2584
        %v2586 = vpop.f32.mrb[0].mxu0
        %v2587 = vadd.f32 %v2446, %v2586
        %v2588 = vpop.f32.mrb[0].mxu0
        %v2589 = vadd.f32 %v2448, %v2588
        %v2590 = vpop.f32.mrb[0].mxu0
        %v2591 = vadd.f32 %v2450, %v2590
        %2592 = vmatprep.mubr.bf16.mxu0 %v856
        %2593 = vmatmul.mubr.bf16.gmra.mrb[0].mxu0 %v855
        %v2594 = vpop.f32.mrb[0].mxu0
        %v2595 = vadd.f32 %v2454, %v2594
        %v2596 = vpop.f32.mrb[0].mxu0
        %v2597 = vadd.f32 %v2456, %v2596
        %v2598 = vpop.f32.mrb[0].mxu0
        %v2599 = vadd.f32 %v2458, %v2598
        %v2600 = vpop.f32.mrb[0].mxu0
        %v2601 = vadd.f32 %v2460, %v2600
        %2602 = vmatprep.mubr.bf16.mxu0 %v864
        %2603 = vmatmul.mubr.bf16.gmra.mrb[0].mxu0 %v863
        %v2604 = vpop.f32.mrb[0].mxu0
        %v2605 = vadd.f32 %v2464, %v2604
        %v2606 = vpop.f32.mrb[0].mxu0
        %v2607 = vadd.f32 %v2466, %v2606
        %v2608 = vpop.f32.mrb[0].mxu0
        %v2609 = vadd.f32 %v2468, %v2608
        %v2610 = vpop.f32.mrb[0].mxu0
        %v2611 = vadd.f32 %v2470, %v2610
        %2612 = vmatprep.mubr.bf16.mxu0 %v872
        %2613 = vmatmul.mubr.bf16.gmra.mrb[0].mxu0 %v871
        %v2614 = vpop.f32.mrb[0].mxu0
        %v2615 = vadd.f32 %v2474, %v2614
        %v2616 = vpop.f32.mrb[0].mxu0
        %v2617 = vadd.f32 %v2476, %v2616
        %v2618 = vpop.f32.mrb[0].mxu0
        %v2619 = vadd.f32 %v2478, %v2618
        %v2620 = vpop.f32.mrb[0].mxu0
        %v2621 = vadd.f32 %v2480, %v2620
        %2622 = vmatprep.mubr.bf16.mxu0 %v880
        %2623 = vmatmul.mubr.bf16.gmra.mrb[0].mxu0 %v879
        %v2624 = vpop.f32.mrb[0].mxu0
        %v2625 = vadd.f32 %v2484, %v2624
        %v2626 = vpop.f32.mrb[0].mxu0
        %v2627 = vadd.f32 %v2486, %v2626
        %v2628 = vpop.f32.mrb[0].mxu0
        %v2629 = vadd.f32 %v2488, %v2628
        %v2630 = vpop.f32.mrb[0].mxu0
        %v2631 = vadd.f32 %v2490, %v2630
        %2632 = vmatprep.mubr.bf16.mxu0 %v888
        %2633 = vmatmul.mubr.bf16.gmra.mrb[0].mxu0 %v887
        %v2634 = vpop.f32.mrb[0].mxu0
        %v2635 = vadd.f32 %v2494, %v2634
        %v2636 = vpop.f32.mrb[0].mxu0
        %v2637 = vadd.f32 %v2496, %v2636
        %v2638 = vpop.f32.mrb[0].mxu0
        %v2639 = vadd.f32 %v2498, %v2638
        %v2640 = vpop.f32.mrb[0].mxu0
        %v2641 = vadd.f32 %v2500, %v2640
        %2642 = vmatprep.mubr.bf16.mxu0 %v896
        %2643 = vmatmul.mubr.bf16.gmra.mrb[0].mxu0 %v895
        %v2644 = vpop.f32.mrb[0].mxu0
        %v2645 = vadd.f32 %v2504, %v2644
        %v2646 = vpop.f32.mrb[0].mxu0
        %v2647 = vadd.f32 %v2506, %v2646
        %v2648 = vpop.f32.mrb[0].mxu0
        %v2649 = vadd.f32 %v2508, %v2648
        %v2650 = vpop.f32.mrb[0].mxu0
        %v2651 = vadd.f32 %v2510, %v2650
        %2652 = vmatprep.mubr.bf16.mxu0 %v904
        %2653 = vmatmul.mubr.bf16.gmra.mrb[0].mxu0 %v903
        %v2654 = vpop.f32.mrb[0].mxu0
        %v2655 = vadd.f32 %v2514, %v2654
        %v2656 = vpop.f32.mrb[0].mxu0
        %v2657 = vadd.f32 %v2516, %v2656
        %v2658 = vpop.f32.mrb[0].mxu0
        %v2659 = vpop.f32.mrb[0].mxu0
        %2660 = vdwg.mxu0
        %2661 = vmatprep.subr.bf16.mxu0 %v1909
        %2662 = vmatpush1.bf16.msra.mxu0 %v1908
        %2663 = vmatprep.subr.bf16.mxu0 %v1913
        %2664 = vmatpush1.bf16.msra.mxu0 %v1912
        %2665 = vmatprep.subr.bf16.mxu0 %v1917
        %2666 = vmatpush1.bf16.msra.mxu0 %v1916
        %2667 = vmatprep.subr.bf16.mxu0 %v1921
        %2668 = vmatpush1.bf16.msra.mxu0 %v1920
        %2669 = vmatprep.subr.bf16.mxu0 %v1925
        %2670 = vmatpush1.bf16.msra.mxu0 %v1924
        %2671 = vmatprep.subr.bf16.mxu0 %v1929
        %2672 = vmatpush1.bf16.msra.mxu0 %v1928
        %2673 = vmatprep.subr.bf16.mxu0 %v1933
        %2674 = vmatpush1.bf16.msra.mxu0 %v1932
        %2675 = vmatprep.subr.bf16.mxu0 %v1937
        %2676 = vmatpush1.bf16.msra.mxu0 %v1936
        %2677 = vmatprep.subr.bf16.mxu0 %v1941
        %2678 = vmatpush1.bf16.msra.mxu0 %v1940
        %2679 = vmatprep.subr.bf16.mxu0 %v1945
        %2680 = vmatpush1.bf16.msra.mxu0 %v1944
        %2681 = vmatprep.subr.bf16.mxu0 %v1949
        %2682 = vmatpush1.bf16.msra.mxu0 %v1948
        %2683 = vmatprep.subr.bf16.mxu0 %v1953
        %2684 = vmatpush1.bf16.msra.mxu0 %v1952
        %2685 = vmatprep.subr.bf16.mxu0 %v1957
        %2686 = vmatpush1.bf16.msra.mxu0 %v1956
        %2687 = vmatprep.subr.bf16.mxu0 0
        %2688 = vmatpush1.bf16.msra.mxu0 0
        %2689 = vmatprep.subr.bf16.mxu0 0
        %2690 = vmatpush1.bf16.msra.mxu0 0
        %2691 = vmatprep.subr.bf16.mxu0 0
        %2692 = vmatpush1.bf16.msra.mxu0 0
        %2693 = vmatprep.mubr.bf16.mxu0 %v2206
        %2694 = vmatmul.mubr.bf16.gmra.mrb[0].mxu0 %v825
        %v2695 = vpop.f32.mrb[0].mxu0
        %v2696 = vadd.f32 %v2555, %v2695
        %v2697 = vpop.f32.mrb[0].mxu0
        %v2698 = vadd.f32 %v2557, %v2697
        %v2699 = vpop.f32.mrb[0].mxu0
        %v2700 = vadd.f32 %v2559, %v2699
        %v2701 = vpop.f32.mrb[0].mxu0
        %v2702 = vadd.f32 %v2561, %v2701
        %2703 = vmatprep.mubr.bf16.mxu0 %v2209
        %2704 = vmatmul.mubr.bf16.gmra.mrb[0].mxu0 %v833
        %v2705 = vpop.f32.mrb[0].mxu0
        %v2706 = vadd.f32 %v2565, %v2705
        %v2707 = vpop.f32.mrb[0].mxu0
        %v2708 = vadd.f32 %v2567, %v2707
        %v2709 = vpop.f32.mrb[0].mxu0
        %v2710 = vadd.f32 %v2569, %v2709
        %v2711 = vpop.f32.mrb[0].mxu0
        %v2712 = vadd.f32 %v2571, %v2711
        %2713 = vmatprep.mubr.bf16.mxu0 %v2212
        %2714 = vmatmul.mubr.bf16.gmra.mrb[0].mxu0 %v841
        %v2715 = vpop.f32.mrb[0].mxu0
        %v2716 = vadd.f32 %v2575, %v2715
        %v2717 = vpop.f32.mrb[0].mxu0
        %v2718 = vadd.f32 %v2577, %v2717
        %v2719 = vpop.f32.mrb[0].mxu0
        %v2720 = vadd.f32 %v2579, %v2719
        %v2721 = vpop.f32.mrb[0].mxu0
        %v2722 = vadd.f32 %v2581, %v2721
        %2723 = vmatprep.mubr.bf16.mxu0 %v2215
        %2724 = vmatmul.mubr.bf16.gmra.mrb[0].mxu0 %v849
        %v2725 = vpop.f32.mrb[0].mxu0
        %v2726 = vadd.f32 %v2585, %v2725
        %v2727 = vpop.f32.mrb[0].mxu0
        %v2728 = vadd.f32 %v2587, %v2727
        %v2729 = vpop.f32.mrb[0].mxu0
        %v2730 = vadd.f32 %v2589, %v2729
        %v2731 = vpop.f32.mrb[0].mxu0
        %v2732 = vadd.f32 %v2591, %v2731
        %2733 = vmatprep.mubr.bf16.mxu0 %v2218
        %2734 = vmatmul.mubr.bf16.gmra.mrb[0].mxu0 %v857
        %v2735 = vpop.f32.mrb[0].mxu0
        %v2736 = vadd.f32 %v2595, %v2735
        %v2737 = vpop.f32.mrb[0].mxu0
        %v2738 = vadd.f32 %v2597, %v2737
        %v2739 = vpop.f32.mrb[0].mxu0
        %v2740 = vadd.f32 %v2599, %v2739
        %v2741 = vpop.f32.mrb[0].mxu0
        %v2742 = vadd.f32 %v2601, %v2741
        %2743 = vmatprep.mubr.bf16.mxu0 %v2221
        %2744 = vmatmul.mubr.bf16.gmra.mrb[0].mxu0 %v865
        %v2745 = vpop.f32.mrb[0].mxu0
        %v2746 = vadd.f32 %v2605, %v2745
        %v2747 = vpop.f32.mrb[0].mxu0
        %v2748 = vadd.f32 %v2607, %v2747
        %v2749 = vpop.f32.mrb[0].mxu0
        %v2750 = vadd.f32 %v2609, %v2749
        %v2751 = vpop.f32.mrb[0].mxu0
        %v2752 = vadd.f32 %v2611, %v2751
        %2753 = vmatprep.mubr.bf16.mxu0 %v2224
        %2754 = vmatmul.mubr.bf16.gmra.mrb[0].mxu0 %v873
        %v2755 = vpop.f32.mrb[0].mxu0
        %v2756 = vadd.f32 %v2615, %v2755
        %v2757 = vpop.f32.mrb[0].mxu0
        %v2758 = vadd.f32 %v2617, %v2757
        %v2759 = vpop.f32.mrb[0].mxu0
        %v2760 = vadd.f32 %v2619, %v2759
        %v2761 = vpop.f32.mrb[0].mxu0
        %v2762 = vadd.f32 %v2621, %v2761
        %2763 = vmatprep.mubr.bf16.mxu0 %v2227
        %2764 = vmatmul.mubr.bf16.gmra.mrb[0].mxu0 %v881
        %v2765 = vpop.f32.mrb[0].mxu0
        %v2766 = vadd.f32 %v2625, %v2765
        %v2767 = vpop.f32.mrb[0].mxu0
        %v2768 = vadd.f32 %v2627, %v2767
        %v2769 = vpop.f32.mrb[0].mxu0
        %v2770 = vadd.f32 %v2629, %v2769
        %v2771 = vpop.f32.mrb[0].mxu0
        %v2772 = vadd.f32 %v2631, %v2771
        %2773 = vmatprep.mubr.bf16.mxu0 %v2230
        %2774 = vmatmul.mubr.bf16.gmra.mrb[0].mxu0 %v889
        %v2775 = vpop.f32.mrb[0].mxu0
        %v2776 = vadd.f32 %v2635, %v2775
        %v2777 = vpop.f32.mrb[0].mxu0
        %v2778 = vadd.f32 %v2637, %v2777
        %v2779 = vpop.f32.mrb[0].mxu0
        %v2780 = vadd.f32 %v2639, %v2779
        %v2781 = vpop.f32.mrb[0].mxu0
        %v2782 = vadd.f32 %v2641, %v2781
        %2783 = vmatprep.mubr.bf16.mxu0 %v2233
        %2784 = vmatmul.mubr.bf16.gmra.mrb[0].mxu0 %v897
        %v2785 = vpop.f32.mrb[0].mxu0
        %v2786 = vadd.f32 %v2645, %v2785
        %v2787 = vpop.f32.mrb[0].mxu0
        %v2788 = vadd.f32 %v2647, %v2787
        %v2789 = vpop.f32.mrb[0].mxu0
        %v2790 = vadd.f32 %v2649, %v2789
        %v2791 = vpop.f32.mrb[0].mxu0
        %v2792 = vadd.f32 %v2651, %v2791
        %2793 = vmatprep.mubr.bf16.mxu0 %v2236
        %2794 = vmatmul.mubr.bf16.gmra.mrb[0].mxu0 %v905
        %v2795 = vpop.f32.mrb[0].mxu0
        %v2796 = vadd.f32 %v2655, %v2795
        %v2797 = vpop.f32.mrb[0].mxu0
        %v2798 = vadd.f32 %v2657, %v2797
        %v2799 = vpop.f32.mrb[0].mxu0
        %v2800 = vpop.f32.mrb[0].mxu0
        %2801 = vdwg.mxu0
        %2802 = vmatprep.subr.bf16.mxu0 %v1719
        %2803 = vmatpush1.bf16.msra.mxu0 %v1718
        %2804 = vmatprep.subr.bf16.mxu0 %v1723
        %2805 = vmatpush1.bf16.msra.mxu0 %v1722
        %2806 = vmatprep.subr.bf16.mxu0 %v1727
        %2807 = vmatpush1.bf16.msra.mxu0 %v1726
        %2808 = vmatprep.subr.bf16.mxu0 %v1731
        %2809 = vmatpush1.bf16.msra.mxu0 %v1730
        %2810 = vmatprep.subr.bf16.mxu0 %v1735
        %2811 = vmatpush1.bf16.msra.mxu0 %v1734
        %2812 = vmatprep.subr.bf16.mxu0 %v1739
        %2813 = vmatpush1.bf16.msra.mxu0 %v1738
        %2814 = vmatprep.subr.bf16.mxu0 %v1743
        %2815 = vmatpush1.bf16.msra.mxu0 %v1742
        %2816 = vmatprep.subr.bf16.mxu0 %v1747
        %2817 = vmatpush1.bf16.msra.mxu0 %v1746
        %2818 = vmatprep.subr.bf16.mxu0 %v1751
        %2819 = vmatpush1.bf16.msra.mxu0 %v1750
        %2820 = vmatprep.subr.bf16.mxu0 %v1755
        %2821 = vmatpush1.bf16.msra.mxu0 %v1754
        %2822 = vmatprep.subr.bf16.mxu0 %v1759
        %2823 = vmatpush1.bf16.msra.mxu0 %v1758
        %2824 = vmatprep.subr.bf16.mxu0 %v1763
        %2825 = vmatpush1.bf16.msra.mxu0 %v1762
        %2826 = vmatprep.subr.bf16.mxu0 %v1767
        %2827 = vmatpush1.bf16.msra.mxu0 %v1766
        %2828 = vmatprep.subr.bf16.mxu0 %v1771
        %2829 = vmatpush1.bf16.msra.mxu0 %v1770
        %2830 = vmatprep.subr.bf16.mxu0 %v1775
        %2831 = vmatpush1.bf16.msra.mxu0 %v1774
        %2832 = vmatprep.subr.bf16.mxu0 %v1779
        %2833 = vmatpush1.bf16.msra.mxu0 %v1778
        %2834 = vmatprep.mubr.bf16.mxu0 %v820
        %2835 = vmatmul.mubr.bf16.gmra.mrb[0].mxu0 %v819
        %v2836 = vpop.f32.mrb[0].mxu0
        %v2837 = vadd.f32 0.0, %v2836
        %v2838 = vpop.f32.mrb[0].mxu0
        %v2839 = vadd.f32 0.0, %v2838
        %v2840 = vpop.f32.mrb[0].mxu0
        %v2841 = vadd.f32 0.0, %v2840
        %v2842 = vpop.f32.mrb[0].mxu0
        %v2843 = vadd.f32 0.0, %v2842
        %2844 = vmatprep.mubr.bf16.mxu0 %v828
        %2845 = vmatmul.mubr.bf16.gmra.mrb[0].mxu0 %v827
        %v2846 = vpop.f32.mrb[0].mxu0
        %v2847 = vadd.f32 0.0, %v2846
        %v2848 = vpop.f32.mrb[0].mxu0
        %v2849 = vadd.f32 0.0, %v2848
        %v2850 = vpop.f32.mrb[0].mxu0
        %v2851 = vadd.f32 0.0, %v2850
        %v2852 = vpop.f32.mrb[0].mxu0
        %v2853 = vadd.f32 0.0, %v2852
        %2854 = vmatprep.mubr.bf16.mxu0 %v836
        %2855 = vmatmul.mubr.bf16.gmra.mrb[0].mxu0 %v835
        %v2856 = vpop.f32.mrb[0].mxu0
        %v2857 = vadd.f32 0.0, %v2856
        %v2858 = vpop.f32.mrb[0].mxu0
        %v2859 = vadd.f32 0.0, %v2858
        %v2860 = vpop.f32.mrb[0].mxu0
        %v2861 = vadd.f32 0.0, %v2860
        %v2862 = vpop.f32.mrb[0].mxu0
        %v2863 = vadd.f32 0.0, %v2862
        %2864 = vmatprep.mubr.bf16.mxu0 %v844
        %2865 = vmatmul.mubr.bf16.gmra.mrb[0].mxu0 %v843
        %v2866 = vpop.f32.mrb[0].mxu0
        %v2867 = vadd.f32 0.0, %v2866
        %v2868 = vpop.f32.mrb[0].mxu0
        %v2869 = vadd.f32 0.0, %v2868
        %v2870 = vpop.f32.mrb[0].mxu0
        %v2871 = vadd.f32 0.0, %v2870
        %v2872 = vpop.f32.mrb[0].mxu0
        %v2873 = vadd.f32 0.0, %v2872
        %2874 = vmatprep.mubr.bf16.mxu0 %v852
        %2875 = vmatmul.mubr.bf16.gmra.mrb[0].mxu0 %v851
        %v2876 = vpop.f32.mrb[0].mxu0
        %v2877 = vadd.f32 0.0, %v2876
        %v2878 = vpop.f32.mrb[0].mxu0
        %v2879 = vadd.f32 0.0, %v2878
        %v2880 = vpop.f32.mrb[0].mxu0
        %v2881 = vadd.f32 0.0, %v2880
        %v2882 = vpop.f32.mrb[0].mxu0
        %v2883 = vadd.f32 0.0, %v2882
        %2884 = vmatprep.mubr.bf16.mxu0 %v860
        %2885 = vmatmul.mubr.bf16.gmra.mrb[0].mxu0 %v859
        %v2886 = vpop.f32.mrb[0].mxu0
        %v2887 = vadd.f32 0.0, %v2886
        %v2888 = vpop.f32.mrb[0].mxu0
        %v2889 = vadd.f32 0.0, %v2888
        %v2890 = vpop.f32.mrb[0].mxu0
        %v2891 = vadd.f32 0.0, %v2890
        %v2892 = vpop.f32.mrb[0].mxu0
        %v2893 = vadd.f32 0.0, %v2892
        %2894 = vmatprep.mubr.bf16.mxu0 %v868
        %2895 = vmatmul.mubr.bf16.gmra.mrb[0].mxu0 %v867
        %v2896 = vpop.f32.mrb[0].mxu0
        %v2897 = vadd.f32 0.0, %v2896
        %v2898 = vpop.f32.mrb[0].mxu0
        %v2899 = vadd.f32 0.0, %v2898
        %v2900 = vpop.f32.mrb[0].mxu0
        %v2901 = vadd.f32 0.0, %v2900
        %v2902 = vpop.f32.mrb[0].mxu0
        %v2903 = vadd.f32 0.0, %v2902
        %2904 = vmatprep.mubr.bf16.mxu0 %v876
        %2905 = vmatmul.mubr.bf16.gmra.mrb[0].mxu0 %v875
        %v2906 = vpop.f32.mrb[0].mxu0
        %v2907 = vadd.f32 0.0, %v2906
        %v2908 = vpop.f32.mrb[0].mxu0
        %v2909 = vadd.f32 0.0, %v2908
        %v2910 = vpop.f32.mrb[0].mxu0
        %v2911 = vadd.f32 0.0, %v2910
        %v2912 = vpop.f32.mrb[0].mxu0
        %v2913 = vadd.f32 0.0, %v2912
        %2914 = vmatprep.mubr.bf16.mxu0 %v884
        %2915 = vmatmul.mubr.bf16.gmra.mrb[0].mxu0 %v883
        %v2916 = vpop.f32.mrb[0].mxu0
        %v2917 = vadd.f32 0.0, %v2916
        %v2918 = vpop.f32.mrb[0].mxu0
        %v2919 = vadd.f32 0.0, %v2918
        %v2920 = vpop.f32.mrb[0].mxu0
        %v2921 = vadd.f32 0.0, %v2920
        %v2922 = vpop.f32.mrb[0].mxu0
        %v2923 = vadd.f32 0.0, %v2922
        %2924 = vmatprep.mubr.bf16.mxu0 %v892
        %2925 = vmatmul.mubr.bf16.gmra.mrb[0].mxu0 %v891
        %v2926 = vpop.f32.mrb[0].mxu0
        %v2927 = vadd.f32 0.0, %v2926
        %v2928 = vpop.f32.mrb[0].mxu0
        %v2929 = vadd.f32 0.0, %v2928
        %v2930 = vpop.f32.mrb[0].mxu0
        %v2931 = vadd.f32 0.0, %v2930
        %v2932 = vpop.f32.mrb[0].mxu0
        %v2933 = vadd.f32 0.0, %v2932
        %2934 = vmatprep.mubr.bf16.mxu0 %v900
        %2935 = vmatmul.mubr.bf16.gmra.mrb[0].mxu0 %v899
        %v2936 = vpop.f32.mrb[0].mxu0
        %v2937 = vadd.f32 0.0, %v2936
        %v2938 = vpop.f32.mrb[0].mxu0
        %v2939 = vadd.f32 0.0, %v2938
        %v2940 = vpop.f32.mrb[0].mxu0
        %v2941 = vpop.f32.mrb[0].mxu0
        %2942 = vdwg.mxu0
        %2943 = vmatprep.subr.bf16.mxu0 %v1783
        %2944 = vmatpush1.bf16.msra.mxu0 %v1782
        %2945 = vmatprep.subr.bf16.mxu0 %v1787
        %2946 = vmatpush1.bf16.msra.mxu0 %v1786
        %2947 = vmatprep.subr.bf16.mxu0 %v1791
        %2948 = vmatpush1.bf16.msra.mxu0 %v1790
        %2949 = vmatprep.subr.bf16.mxu0 %v1795
        %2950 = vmatpush1.bf16.msra.mxu0 %v1794
        %2951 = vmatprep.subr.bf16.mxu0 %v1799
        %2952 = vmatpush1.bf16.msra.mxu0 %v1798
        %2953 = vmatprep.subr.bf16.mxu0 %v1803
        %2954 = vmatpush1.bf16.msra.mxu0 %v1802
        %2955 = vmatprep.subr.bf16.mxu0 %v1807
        %2956 = vmatpush1.bf16.msra.mxu0 %v1806
        %2957 = vmatprep.subr.bf16.mxu0 %v1811
        %2958 = vmatpush1.bf16.msra.mxu0 %v1810
        %2959 = vmatprep.subr.bf16.mxu0 %v1815
        %2960 = vmatpush1.bf16.msra.mxu0 %v1814
        %2961 = vmatprep.subr.bf16.mxu0 %v1819
        %2962 = vmatpush1.bf16.msra.mxu0 %v1818
        %2963 = vmatprep.subr.bf16.mxu0 %v1823
        %2964 = vmatpush1.bf16.msra.mxu0 %v1822
        %2965 = vmatprep.subr.bf16.mxu0 %v1827
        %2966 = vmatpush1.bf16.msra.mxu0 %v1826
        %2967 = vmatprep.subr.bf16.mxu0 %v1831
        %2968 = vmatpush1.bf16.msra.mxu0 %v1830
        %2969 = vmatprep.subr.bf16.mxu0 %v1835
        %2970 = vmatpush1.bf16.msra.mxu0 %v1834
        %2971 = vmatprep.subr.bf16.mxu0 %v1839
        %2972 = vmatpush1.bf16.msra.mxu0 %v1838
        %2973 = vmatprep.subr.bf16.mxu0 %v1843
        %2974 = vmatpush1.bf16.msra.mxu0 %v1842
        %2975 = vmatprep.mubr.bf16.mxu0 %v822
        %2976 = vmatmul.mubr.bf16.gmra.mrb[0].mxu0 %v821
        %v2977 = vpop.f32.mrb[0].mxu0
        %v2978 = vadd.f32 %v2837, %v2977
        %v2979 = vpop.f32.mrb[0].mxu0
        %v2980 = vadd.f32 %v2839, %v2979
        %v2981 = vpop.f32.mrb[0].mxu0
        %v2982 = vadd.f32 %v2841, %v2981
        %v2983 = vpop.f32.mrb[0].mxu0
        %v2984 = vadd.f32 %v2843, %v2983
        %2985 = vmatprep.mubr.bf16.mxu0 %v830
        %2986 = vmatmul.mubr.bf16.gmra.mrb[0].mxu0 %v829
        %v2987 = vpop.f32.mrb[0].mxu0
        %v2988 = vadd.f32 %v2847, %v2987
        %v2989 = vpop.f32.mrb[0].mxu0
        %v2990 = vadd.f32 %v2849, %v2989
        %v2991 = vpop.f32.mrb[0].mxu0
        %v2992 = vadd.f32 %v2851, %v2991
        %v2993 = vpop.f32.mrb[0].mxu0
        %v2994 = vadd.f32 %v2853, %v2993
        %2995 = vmatprep.mubr.bf16.mxu0 %v838
        %2996 = vmatmul.mubr.bf16.gmra.mrb[0].mxu0 %v837
        %v2997 = vpop.f32.mrb[0].mxu0
        %v2998 = vadd.f32 %v2857, %v2997
        %v2999 = vpop.f32.mrb[0].mxu0
        %v3000 = vadd.f32 %v2859, %v2999
        %v3001 = vpop.f32.mrb[0].mxu0
        %v3002 = vadd.f32 %v2861, %v3001
        %v3003 = vpop.f32.mrb[0].mxu0
        %v3004 = vadd.f32 %v2863, %v3003
        %3005 = vmatprep.mubr.bf16.mxu0 %v846
        %3006 = vmatmul.mubr.bf16.gmra.mrb[0].mxu0 %v845
        %v3007 = vpop.f32.mrb[0].mxu0
        %v3008 = vadd.f32 %v2867, %v3007
        %v3009 = vpop.f32.mrb[0].mxu0
        %v3010 = vadd.f32 %v2869, %v3009
        %v3011 = vpop.f32.mrb[0].mxu0
        %v3012 = vadd.f32 %v2871, %v3011
        %v3013 = vpop.f32.mrb[0].mxu0
        %v3014 = vadd.f32 %v2873, %v3013
        %3015 = vmatprep.mubr.bf16.mxu0 %v854
        %3016 = vmatmul.mubr.bf16.gmra.mrb[0].mxu0 %v853
        %v3017 = vpop.f32.mrb[0].mxu0
        %v3018 = vadd.f32 %v2877, %v3017
        %v3019 = vpop.f32.mrb[0].mxu0
        %v3020 = vadd.f32 %v2879, %v3019
        %v3021 = vpop.f32.mrb[0].mxu0
        %v3022 = vadd.f32 %v2881, %v3021
        %v3023 = vpop.f32.mrb[0].mxu0
        %v3024 = vadd.f32 %v2883, %v3023
        %3025 = vmatprep.mubr.bf16.mxu0 %v862
        %3026 = vmatmul.mubr.bf16.gmra.mrb[0].mxu0 %v861
        %v3027 = vpop.f32.mrb[0].mxu0
        %v3028 = vadd.f32 %v2887, %v3027
        %v3029 = vpop.f32.mrb[0].mxu0
        %v3030 = vadd.f32 %v2889, %v3029
        %v3031 = vpop.f32.mrb[0].mxu0
        %v3032 = vadd.f32 %v2891, %v3031
        %v3033 = vpop.f32.mrb[0].mxu0
        %v3034 = vadd.f32 %v2893, %v3033
        %3035 = vmatprep.mubr.bf16.mxu0 %v870
        %3036 = vmatmul.mubr.bf16.gmra.mrb[0].mxu0 %v869
        %v3037 = vpop.f32.mrb[0].mxu0
        %v3038 = vadd.f32 %v2897, %v3037
        %v3039 = vpop.f32.mrb[0].mxu0
        %v3040 = vadd.f32 %v2899, %v3039
        %v3041 = vpop.f32.mrb[0].mxu0
        %v3042 = vadd.f32 %v2901, %v3041
        %v3043 = vpop.f32.mrb[0].mxu0
        %v3044 = vadd.f32 %v2903, %v3043
        %3045 = vmatprep.mubr.bf16.mxu0 %v878
        %3046 = vmatmul.mubr.bf16.gmra.mrb[0].mxu0 %v877
        %v3047 = vpop.f32.mrb[0].mxu0
        %v3048 = vadd.f32 %v2907, %v3047
        %v3049 = vpop.f32.mrb[0].mxu0
        %v3050 = vadd.f32 %v2909, %v3049
        %v3051 = vpop.f32.mrb[0].mxu0
        %v3052 = vadd.f32 %v2911, %v3051
        %v3053 = vpop.f32.mrb[0].mxu0
        %v3054 = vadd.f32 %v2913, %v3053
        %3055 = vmatprep.mubr.bf16.mxu0 %v886
        %3056 = vmatmul.mubr.bf16.gmra.mrb[0].mxu0 %v885
        %v3057 = vpop.f32.mrb[0].mxu0
        %v3058 = vadd.f32 %v2917, %v3057
        %v3059 = vpop.f32.mrb[0].mxu0
        %v3060 = vadd.f32 %v2919, %v3059
        %v3061 = vpop.f32.mrb[0].mxu0
        %v3062 = vadd.f32 %v2921, %v3061
        %v3063 = vpop.f32.mrb[0].mxu0
        %v3064 = vadd.f32 %v2923, %v3063
        %3065 = vmatprep.mubr.bf16.mxu0 %v894
        %3066 = vmatmul.mubr.bf16.gmra.mrb[0].mxu0 %v893
        %v3067 = vpop.f32.mrb[0].mxu0
        %v3068 = vadd.f32 %v2927, %v3067
        %v3069 = vpop.f32.mrb[0].mxu0
        %v3070 = vadd.f32 %v2929, %v3069
        %v3071 = vpop.f32.mrb[0].mxu0
        %v3072 = vadd.f32 %v2931, %v3071
        %v3073 = vpop.f32.mrb[0].mxu0
        %v3074 = vadd.f32 %v2933, %v3073
        %3075 = vmatprep.mubr.bf16.mxu0 %v902
        %3076 = vmatmul.mubr.bf16.gmra.mrb[0].mxu0 %v901
        %v3077 = vpop.f32.mrb[0].mxu0
        %v3078 = vadd.f32 %v2937, %v3077
        %v3079 = vpop.f32.mrb[0].mxu0
        %v3080 = vadd.f32 %v2939, %v3079
        %v3081 = vpop.f32.mrb[0].mxu0
        %v3082 = vpop.f32.mrb[0].mxu0
        %3083 = vdwg.mxu0
        %3084 = vmatprep.subr.bf16.mxu0 %v1847
        %3085 = vmatpush1.bf16.msra.mxu0 %v1846
        %3086 = vmatprep.subr.bf16.mxu0 %v1851
        %3087 = vmatpush1.bf16.msra.mxu0 %v1850
        %3088 = vmatprep.subr.bf16.mxu0 %v1855
        %3089 = vmatpush1.bf16.msra.mxu0 %v1854
        %3090 = vmatprep.subr.bf16.mxu0 %v1859
        %3091 = vmatpush1.bf16.msra.mxu0 %v1858
        %3092 = vmatprep.subr.bf16.mxu0 %v1863
        %3093 = vmatpush1.bf16.msra.mxu0 %v1862
        %3094 = vmatprep.subr.bf16.mxu0 %v1867
        %3095 = vmatpush1.bf16.msra.mxu0 %v1866
        %3096 = vmatprep.subr.bf16.mxu0 %v1871
        %3097 = vmatpush1.bf16.msra.mxu0 %v1870
        %3098 = vmatprep.subr.bf16.mxu0 %v1875
        %3099 = vmatpush1.bf16.msra.mxu0 %v1874
        %3100 = vmatprep.subr.bf16.mxu0 %v1879
        %3101 = vmatpush1.bf16.msra.mxu0 %v1878
        %3102 = vmatprep.subr.bf16.mxu0 %v1883
        %3103 = vmatpush1.bf16.msra.mxu0 %v1882
        %3104 = vmatprep.subr.bf16.mxu0 %v1887
        %3105 = vmatpush1.bf16.msra.mxu0 %v1886
        %3106 = vmatprep.subr.bf16.mxu0 %v1891
        %3107 = vmatpush1.bf16.msra.mxu0 %v1890
        %3108 = vmatprep.subr.bf16.mxu0 %v1895
        %3109 = vmatpush1.bf16.msra.mxu0 %v1894
        %3110 = vmatprep.subr.bf16.mxu0 %v1899
        %3111 = vmatpush1.bf16.msra.mxu0 %v1898
        %3112 = vmatprep.subr.bf16.mxu0 %v1903
        %3113 = vmatpush1.bf16.msra.mxu0 %v1902
        %3114 = vmatprep.subr.bf16.mxu0 %v1907
        %3115 = vmatpush1.bf16.msra.mxu0 %v1906
        %3116 = vmatprep.mubr.bf16.mxu0 %v824
        %3117 = vmatmul.mubr.bf16.gmra.mrb[0].mxu0 %v823
        %v3118 = vpop.f32.mrb[0].mxu0
        %v3119 = vadd.f32 %v2978, %v3118
        %v3120 = vpop.f32.mrb[0].mxu0
        %v3121 = vadd.f32 %v2980, %v3120
        %v3122 = vpop.f32.mrb[0].mxu0
        %v3123 = vadd.f32 %v2982, %v3122
        %v3124 = vpop.f32.mrb[0].mxu0
        %v3125 = vadd.f32 %v2984, %v3124
        %3126 = vmatprep.mubr.bf16.mxu0 %v832
        %3127 = vmatmul.mubr.bf16.gmra.mrb[0].mxu0 %v831
        %v3128 = vpop.f32.mrb[0].mxu0
        %v3129 = vadd.f32 %v2988, %v3128
        %v3130 = vpop.f32.mrb[0].mxu0
        %v3131 = vadd.f32 %v2990, %v3130
        %v3132 = vpop.f32.mrb[0].mxu0
        %v3133 = vadd.f32 %v2992, %v3132
        %v3134 = vpop.f32.mrb[0].mxu0
        %v3135 = vadd.f32 %v2994, %v3134
        %3136 = vmatprep.mubr.bf16.mxu0 %v840
        %3137 = vmatmul.mubr.bf16.gmra.mrb[0].mxu0 %v839
        %v3138 = vpop.f32.mrb[0].mxu0
        %v3139 = vadd.f32 %v2998, %v3138
        %v3140 = vpop.f32.mrb[0].mxu0
        %v3141 = vadd.f32 %v3000, %v3140
        %v3142 = vpop.f32.mrb[0].mxu0
        %v3143 = vadd.f32 %v3002, %v3142
        %v3144 = vpop.f32.mrb[0].mxu0
        %v3145 = vadd.f32 %v3004, %v3144
        %3146 = vmatprep.mubr.bf16.mxu0 %v848
        %3147 = vmatmul.mubr.bf16.gmra.mrb[0].mxu0 %v847
        %v3148 = vpop.f32.mrb[0].mxu0
        %v3149 = vadd.f32 %v3008, %v3148
        %v3150 = vpop.f32.mrb[0].mxu0
        %v3151 = vadd.f32 %v3010, %v3150
        %v3152 = vpop.f32.mrb[0].mxu0
        %v3153 = vadd.f32 %v3012, %v3152
        %v3154 = vpop.f32.mrb[0].mxu0
        %v3155 = vadd.f32 %v3014, %v3154
        %3156 = vmatprep.mubr.bf16.mxu0 %v856
        %3157 = vmatmul.mubr.bf16.gmra.mrb[0].mxu0 %v855
        %v3158 = vpop.f32.mrb[0].mxu0
        %v3159 = vadd.f32 %v3018, %v3158
        %v3160 = vpop.f32.mrb[0].mxu0
        %v3161 = vadd.f32 %v3020, %v3160
        %v3162 = vpop.f32.mrb[0].mxu0
        %v3163 = vadd.f32 %v3022, %v3162
        %v3164 = vpop.f32.mrb[0].mxu0
        %v3165 = vadd.f32 %v3024, %v3164
        %3166 = vmatprep.mubr.bf16.mxu0 %v864
        %3167 = vmatmul.mubr.bf16.gmra.mrb[0].mxu0 %v863
        %v3168 = vpop.f32.mrb[0].mxu0
        %v3169 = vadd.f32 %v3028, %v3168
        %v3170 = vpop.f32.mrb[0].mxu0
        %v3171 = vadd.f32 %v3030, %v3170
        %v3172 = vpop.f32.mrb[0].mxu0
        %v3173 = vadd.f32 %v3032, %v3172
        %v3174 = vpop.f32.mrb[0].mxu0
        %v3175 = vadd.f32 %v3034, %v3174
        %3176 = vmatprep.mubr.bf16.mxu0 %v872
        %3177 = vmatmul.mubr.bf16.gmra.mrb[0].mxu0 %v871
        %v3178 = vpop.f32.mrb[0].mxu0
        %v3179 = vadd.f32 %v3038, %v3178
        %v3180 = vpop.f32.mrb[0].mxu0
        %v3181 = vadd.f32 %v3040, %v3180
        %v3182 = vpop.f32.mrb[0].mxu0
        %v3183 = vadd.f32 %v3042, %v3182
        %v3184 = vpop.f32.mrb[0].mxu0
        %v3185 = vadd.f32 %v3044, %v3184
        %3186 = vmatprep.mubr.bf16.mxu0 %v880
        %3187 = vmatmul.mubr.bf16.gmra.mrb[0].mxu0 %v879
        %v3188 = vpop.f32.mrb[0].mxu0
        %v3189 = vadd.f32 %v3048, %v3188
        %v3190 = vpop.f32.mrb[0].mxu0
        %v3191 = vadd.f32 %v3050, %v3190
        %v3192 = vpop.f32.mrb[0].mxu0
        %v3193 = vadd.f32 %v3052, %v3192
        %v3194 = vpop.f32.mrb[0].mxu0
        %v3195 = vadd.f32 %v3054, %v3194
        %3196 = vmatprep.mubr.bf16.mxu0 %v888
        %3197 = vmatmul.mubr.bf16.gmra.mrb[0].mxu0 %v887
        %v3198 = vpop.f32.mrb[0].mxu0
        %v3199 = vadd.f32 %v3058, %v3198
        %v3200 = vpop.f32.mrb[0].mxu0
        %v3201 = vadd.f32 %v3060, %v3200
        %v3202 = vpop.f32.mrb[0].mxu0
        %v3203 = vadd.f32 %v3062, %v3202
        %v3204 = vpop.f32.mrb[0].mxu0
        %v3205 = vadd.f32 %v3064, %v3204
        %3206 = vmatprep.mubr.bf16.mxu0 %v896
        %3207 = vmatmul.mubr.bf16.gmra.mrb[0].mxu0 %v895
        %v3208 = vpop.f32.mrb[0].mxu0
        %v3209 = vadd.f32 %v3068, %v3208
        %v3210 = vpop.f32.mrb[0].mxu0
        %v3211 = vadd.f32 %v3070, %v3210
        %v3212 = vpop.f32.mrb[0].mxu0
        %v3213 = vadd.f32 %v3072, %v3212
        %v3214 = vpop.f32.mrb[0].mxu0
        %v3215 = vadd.f32 %v3074, %v3214
        %3216 = vmatprep.mubr.bf16.mxu0 %v904
        %3217 = vmatmul.mubr.bf16.gmra.mrb[0].mxu0 %v903
        %v3218 = vpop.f32.mrb[0].mxu0
        %v3219 = vadd.f32 %v3078, %v3218
        %v3220 = vpop.f32.mrb[0].mxu0
        %v3221 = vadd.f32 %v3080, %v3220
        %v3222 = vpop.f32.mrb[0].mxu0
        %v3223 = vpop.f32.mrb[0].mxu0
        %3224 = vdwg.mxu0
        %3225 = vmatprep.subr.bf16.mxu0 %v1911
        %3226 = vmatpush1.bf16.msra.mxu0 %v1910
        %3227 = vmatprep.subr.bf16.mxu0 %v1915
        %3228 = vmatpush1.bf16.msra.mxu0 %v1914
        %3229 = vmatprep.subr.bf16.mxu0 %v1919
        %3230 = vmatpush1.bf16.msra.mxu0 %v1918
        %3231 = vmatprep.subr.bf16.mxu0 %v1923
        %3232 = vmatpush1.bf16.msra.mxu0 %v1922
        %3233 = vmatprep.subr.bf16.mxu0 %v1927
        %3234 = vmatpush1.bf16.msra.mxu0 %v1926
        %3235 = vmatprep.subr.bf16.mxu0 %v1931
        %3236 = vmatpush1.bf16.msra.mxu0 %v1930
        %3237 = vmatprep.subr.bf16.mxu0 %v1935
        %3238 = vmatpush1.bf16.msra.mxu0 %v1934
        %3239 = vmatprep.subr.bf16.mxu0 %v1939
        %3240 = vmatpush1.bf16.msra.mxu0 %v1938
        %3241 = vmatprep.subr.bf16.mxu0 %v1943
        %3242 = vmatpush1.bf16.msra.mxu0 %v1942
        %3243 = vmatprep.subr.bf16.mxu0 %v1947
        %3244 = vmatpush1.bf16.msra.mxu0 %v1946
        %3245 = vmatprep.subr.bf16.mxu0 %v1951
        %3246 = vmatpush1.bf16.msra.mxu0 %v1950
        %3247 = vmatprep.subr.bf16.mxu0 %v1955
        %3248 = vmatpush1.bf16.msra.mxu0 %v1954
        %3249 = vmatprep.subr.bf16.mxu0 %v1959
        %3250 = vmatpush1.bf16.msra.mxu0 %v1958
        %3251 = vmatprep.subr.bf16.mxu0 0
        %3252 = vmatpush1.bf16.msra.mxu0 0
        %3253 = vmatprep.subr.bf16.mxu0 0
        %3254 = vmatpush1.bf16.msra.mxu0 0
        %3255 = vmatprep.subr.bf16.mxu0 0
        %3256 = vmatpush1.bf16.msra.mxu0 0
        %3257 = vmatprep.mubr.bf16.mxu0 %v2206
        %3258 = vmatmul.mubr.bf16.gmra.mrb[0].mxu0 %v825
        %v3259 = vpop.f32.mrb[0].mxu0
        %v3260 = vadd.f32 %v3119, %v3259
        %v3261 = vpop.f32.mrb[0].mxu0
        %v3262 = vadd.f32 %v3121, %v3261
        %v3263 = vpop.f32.mrb[0].mxu0
        %v3264 = vadd.f32 %v3123, %v3263
        %v3265 = vpop.f32.mrb[0].mxu0
        %v3266 = vadd.f32 %v3125, %v3265
        %3267 = vmatprep.mubr.bf16.mxu0 %v2209
        %3268 = vmatmul.mubr.bf16.gmra.mrb[0].mxu0 %v833
        %v3269 = vpop.f32.mrb[0].mxu0
        %v3270 = vadd.f32 %v3129, %v3269
        %v3271 = vpop.f32.mrb[0].mxu0
        %v3272 = vadd.f32 %v3131, %v3271
        %v3273 = vpop.f32.mrb[0].mxu0
        %v3274 = vadd.f32 %v3133, %v3273
        %v3275 = vpop.f32.mrb[0].mxu0
        %v3276 = vadd.f32 %v3135, %v3275
        %3277 = vmatprep.mubr.bf16.mxu0 %v2212
        %3278 = vmatmul.mubr.bf16.gmra.mrb[0].mxu0 %v841
        %v3279 = vpop.f32.mrb[0].mxu0
        %v3280 = vadd.f32 %v3139, %v3279
        %v3281 = vpop.f32.mrb[0].mxu0
        %v3282 = vadd.f32 %v3141, %v3281
        %v3283 = vpop.f32.mrb[0].mxu0
        %v3284 = vadd.f32 %v3143, %v3283
        %v3285 = vpop.f32.mrb[0].mxu0
        %v3286 = vadd.f32 %v3145, %v3285
        %3287 = vmatprep.mubr.bf16.mxu0 %v2215
        %3288 = vmatmul.mubr.bf16.gmra.mrb[0].mxu0 %v849
        %v3289 = vpop.f32.mrb[0].mxu0
        %v3290 = vadd.f32 %v3149, %v3289
        %v3291 = vpop.f32.mrb[0].mxu0
        %v3292 = vadd.f32 %v3151, %v3291
        %v3293 = vpop.f32.mrb[0].mxu0
        %v3294 = vadd.f32 %v3153, %v3293
        %v3295 = vpop.f32.mrb[0].mxu0
        %v3296 = vadd.f32 %v3155, %v3295
        %3297 = vmatprep.mubr.bf16.mxu0 %v2218
        %3298 = vmatmul.mubr.bf16.gmra.mrb[0].mxu0 %v857
        %v3299 = vpop.f32.mrb[0].mxu0
        %v3300 = vadd.f32 %v3159, %v3299
        %v3301 = vpop.f32.mrb[0].mxu0
        %v3302 = vadd.f32 %v3161, %v3301
        %v3303 = vpop.f32.mrb[0].mxu0
        %v3304 = vadd.f32 %v3163, %v3303
        %v3305 = vpop.f32.mrb[0].mxu0
        %v3306 = vadd.f32 %v3165, %v3305
        %3307 = vmatprep.mubr.bf16.mxu0 %v2221
        %3308 = vmatmul.mubr.bf16.gmra.mrb[0].mxu0 %v865
        %v3309 = vpop.f32.mrb[0].mxu0
        %v3310 = vadd.f32 %v3169, %v3309
        %v3311 = vpop.f32.mrb[0].mxu0
        %v3312 = vadd.f32 %v3171, %v3311
        %v3313 = vpop.f32.mrb[0].mxu0
        %v3314 = vadd.f32 %v3173, %v3313
        %v3315 = vpop.f32.mrb[0].mxu0
        %v3316 = vadd.f32 %v3175, %v3315
        %3317 = vmatprep.mubr.bf16.mxu0 %v2224
        %3318 = vmatmul.mubr.bf16.gmra.mrb[0].mxu0 %v873
        %v3319 = vpop.f32.mrb[0].mxu0
        %v3320 = vadd.f32 %v3179, %v3319
        %v3321 = vpop.f32.mrb[0].mxu0
        %v3322 = vadd.f32 %v3181, %v3321
        %v3323 = vpop.f32.mrb[0].mxu0
        %v3324 = vadd.f32 %v3183, %v3323
        %v3325 = vpop.f32.mrb[0].mxu0
        %v3326 = vadd.f32 %v3185, %v3325
        %3327 = vmatprep.mubr.bf16.mxu0 %v2227
        %3328 = vmatmul.mubr.bf16.gmra.mrb[0].mxu0 %v881
        %v3329 = vpop.f32.mrb[0].mxu0
        %v3330 = vadd.f32 %v3189, %v3329
        %v3331 = vpop.f32.mrb[0].mxu0
        %v3332 = vadd.f32 %v3191, %v3331
        %v3333 = vpop.f32.mrb[0].mxu0
        %v3334 = vadd.f32 %v3193, %v3333
        %v3335 = vpop.f32.mrb[0].mxu0
        %v3336 = vadd.f32 %v3195, %v3335
        %3337 = vmatprep.mubr.bf16.mxu0 %v2230
        %3338 = vmatmul.mubr.bf16.gmra.mrb[0].mxu0 %v889
        %v3339 = vpop.f32.mrb[0].mxu0
        %v3340 = vadd.f32 %v3199, %v3339
        %v3341 = vpop.f32.mrb[0].mxu0
        %v3342 = vadd.f32 %v3201, %v3341
        %v3343 = vpop.f32.mrb[0].mxu0
        %v3344 = vadd.f32 %v3203, %v3343
        %v3345 = vpop.f32.mrb[0].mxu0
        %v3346 = vadd.f32 %v3205, %v3345
        %3347 = vmatprep.mubr.bf16.mxu0 %v2233
        %3348 = vmatmul.mubr.bf16.gmra.mrb[0].mxu0 %v897
        %v3349 = vpop.f32.mrb[0].mxu0
        %v3350 = vadd.f32 %v3209, %v3349
        %v3351 = vpop.f32.mrb[0].mxu0
        %v3352 = vadd.f32 %v3211, %v3351
        %v3353 = vpop.f32.mrb[0].mxu0
        %v3354 = vadd.f32 %v3213, %v3353
        %v3355 = vpop.f32.mrb[0].mxu0
        %v3356 = vadd.f32 %v3215, %v3355
        %3357 = vmatprep.mubr.bf16.mxu0 %v2236
        %3358 = vmatmul.mubr.bf16.gmra.mrb[0].mxu0 %v905
        %v3359 = vpop.f32.mrb[0].mxu0
        %v3360 = vadd.f32 %v3219, %v3359
        %v3361 = vpop.f32.mrb[0].mxu0
        %v3362 = vadd.f32 %v3221, %v3361
        %v3363 = vpop.f32.mrb[0].mxu0
        %v3364 = vpop.f32.mrb[0].mxu0
        %3365 = vdwg.mxu0
        %v3366 = vmax.f32 %v2696, %v2710
        %v3367 = vmax.f32 %v2698, %v2712
        %v3368 = vmax.f32 %v3260, %v3274
        %v3369 = vmax.f32 %v3262, %v3276
        %v3370 = vmax.f32 %v2700, %v2716
        %v3371 = vmax.f32 %v2702, %v2718
        %v3372 = vmax.f32 %v3264, %v3280
        %v3373 = vmax.f32 %v3266, %v3282
        %v3374 = vmax.f32 %v2706, %v2720
        %v3375 = vmax.f32 %v2708, %v2722
        %v3376 = vmax.f32 %v3270, %v3284
        %v3377 = vmax.f32 %v3272, %v3286
        %v3378 = vmax.f32 %v3366, %v2726
        %v3379 = vmax.f32 %v3367, %v2728
        %v3380 = vmax.f32 %v3368, %v3290
        %v3381 = vmax.f32 %v3369, %v3292
        %v3382 = vmax.f32 %v3370, %v2730
        %v3383 = vmax.f32 %v3371, %v2732
        %v3384 = vmax.f32 %v3372, %v3294
        %v3385 = vmax.f32 %v3373, %v3296
        %v3386 = vmax.f32 %v3374, %v2736
        %v3387 = vmax.f32 %v3375, %v2738
        %v3388 = vmax.f32 %v3376, %v3300
        %v3389 = vmax.f32 %v3377, %v3302
        %v3390 = vmax.f32 %v3378, %v2740
        %v3391 = vmax.f32 %v3379, %v2742
        %v3392 = vmax.f32 %v3380, %v3304
        %v3393 = vmax.f32 %v3381, %v3306
        %v3394 = vmax.f32 %v3382, %v2746
        %v3395 = vmax.f32 %v3383, %v2748
        %v3396 = vmax.f32 %v3384, %v3310
        %v3397 = vmax.f32 %v3385, %v3312
        %v3398 = vmax.f32 %v3386, %v2750
        %v3399 = vmax.f32 %v3387, %v2752
        %v3400 = vmax.f32 %v3388, %v3314
        %v3401 = vmax.f32 %v3389, %v3316
        %v3402 = vmax.f32 %v3390, %v2756
        %v3403 = vmax.f32 %v3391, %v2758
        %v3404 = vmax.f32 %v3392, %v3320
        %v3405 = vmax.f32 %v3393, %v3322
        %v3406 = vmax.f32 %v3394, %v2760
        %v3407 = vmax.f32 %v3395, %v2762
        %v3408 = vmax.f32 %v3396, %v3324
        %v3409 = vmax.f32 %v3397, %v3326
        %v3410 = vmax.f32 %v3398, %v2766
        %v3411 = vmax.f32 %v3399, %v2768
        %v3412 = vmax.f32 %v3400, %v3330
        %v3413 = vmax.f32 %v3401, %v3332
        %v3414 = vmax.f32 %v3402, %v2770
        %v3415 = vmax.f32 %v3403, %v2772
        %v3416 = vmax.f32 %v3404, %v3334
        %v3417 = vmax.f32 %v3405, %v3336
        %v3418 = vmax.f32 %v3406, %v2776
        %v3419 = vmax.f32 %v3407, %v2778
        %v3420 = vmax.f32 %v3408, %v3340
        %v3421 = vmax.f32 %v3409, %v3342
        %v3422 = vmax.f32 %v3410, %v2780
        %v3423 = vmax.f32 %v3411, %v2782
        %v3424 = vmax.f32 %v3412, %v3344
        %v3425 = vmax.f32 %v3413, %v3346
        %v3426 = vmax.f32 %v3414, %v2786
        %v3427 = vmax.f32 %v3415, %v2788
        %v3428 = vmax.f32 %v3416, %v3350
        %v3429 = vmax.f32 %v3417, %v3352
        %v3430 = vmax.f32 %v3418, %v2790
        %v3431 = vmax.f32 %v3419, %v2792
        %v3432 = vmax.f32 %v3420, %v3354
        %v3433 = vmax.f32 %v3421, %v3356
        %v3434 = vmax.f32 %v3422, %v2796
        %v3435 = vmax.f32 %v3423, %v2798
        %v3436 = vmax.f32 %v3424, %v3360
        %v3437 = vmax.f32 %v3425, %v3362
        %3438 = vst [vmem:[%s219] sm:$0xff] %v3426
        %3439 = vst [vmem:[%s219 + $0x8] sm:$0xff] %v3427
        %3440 = vst [vmem:[%s219 + $0x10] sm:$0xff] %v3428
        %3441 = vst [vmem:[%s219 + $0x18] sm:$0xff] %v3429
        %3442 = vst [vmem:[%s219 + $0x20] sm:$0xff] %v3430
        %3443 = vst [vmem:[%s219 + $0x28] sm:$0xff] %v3431
        %3444 = vst [vmem:[%s219 + $0x30] sm:$0xff] %v3432
        %3445 = vst [vmem:[%s219 + $0x38] sm:$0xff] %v3433
        %3446 = vst [vmem:[%s219 + $0x40] sm:$0xff] %v3434
        %3447 = vst [vmem:[%s219 + $0x48] sm:$0xff] %v3435
        %3448 = vst [vmem:[%s219 + $0x50] sm:$0xff] %v3436
        %3449 = vst [vmem:[%s219 + $0x58] sm:$0xff] %v3437
        %s3450 = sand.u32 %s98, 1
        %s3451 = scalar_lea.sflag [#allocation4], %s3450
        %s3452 = sand.u32 %s98, 1
        %s3453 = smul.addr %s3452, 96
        %s3454 = scalar_lea.vmem [#allocation7], %s3453
        // Predicated region
        $region37: #{tpu_custom_call.1} parent=27 // pred_check
          %p3455 = pneg %p108
        $region38: #{tpu_custom_call.1} parent=27 // pred_check_branch
          %3457 = sbr.rel (%p3455) target = $region40
        $region39: #{tpu_custom_call.1} parent=27 // pred_region
          %s3458 = smul.u32 4, %s27
          %s3460 = ssub.s32 1536, 1536
          %3461 = vsyncadd %s3451, %s3460
          %s3462 = smul.addr %s26, 12
          %s3463 = sadd.s32 %s3458, %s3462
          %s3464 = smul.addr %s3463, 128
          %s3465 = scalar_lea.hbm %s2, %s3464
          %s3466 = sshll.u32 %s3454, 4
          %s3467 = int_to_ptr.vmem [resolvable:$true] %s3466
          %3472 = dma.vmem_to_hbm [thread:$0]  %s3467, 1536, %s3465, %s3451, 512, 512, 32
        $region40: #{tpu_custom_call.1} parent=27 // pred_fallthru
          _
      $region28: #{tpu_custom_call.1} parent=5 // pred_fallthru
        _
      %p3473 = scmp.le.s32.totalorder 2, %s17
      // Predicated region
      $region41: #{tpu_custom_call.1} parent=5 // pred_check
        %p3474 = pneg %p3473
      $region42: #{tpu_custom_call.1} parent=5 // pred_check_branch
        %3476 = sbr.rel (%p3474) target = $region44
      $region43: #{tpu_custom_call.1} parent=5 // pred_region
        %s3477 = ssub.s32 %s17, 2
        // Predicated region
        $region45: #{tpu_custom_call.1} parent=43 // pred_check
          %p3478 = pneg %p114
        $region46: #{tpu_custom_call.1} parent=43 // pred_check_branch
          %3480 = sbr.rel (%p3478) target = $region48
        $region47: #{tpu_custom_call.1} parent=43 // pred_region
          %s3481 = sand.u32 %s99, 1
          %s3482 = scalar_lea.sflag [#allocation4], %s3481
          %s3483 = sand.u32 %s99, 1
          %s3484 = smul.addr %s3483, 96
          %s3485 = scalar_lea.vmem [#allocation7], %s3484
          %3486 = dma.done %s3482, 1536
        $region48: #{tpu_custom_call.1} parent=43 // pred_fallthru
          _
      $region44: #{tpu_custom_call.1} parent=5 // pred_fallthru
        _
    $region6: #{tpu_custom_call.1} parent=1 // loop_footer
      %s21 = sadd.s32 1, %s17
    $region7: #{tpu_custom_call.1} parent=1 // loop_footer_branch
      %16 = sbr.rel target = $region3
    $region8: #{tpu_custom_call.1} parent=1 // loop_exit
      _
    %3487 = vsyncpa [#allocation3], 1
    %s3488 = scalar_lea.sflag [#allocation3], 1
    %3489 = vsyncpa %s3488, 1
    %3490 = vsyncpa [#allocation6], 1
    %s3491 = scalar_lea.sflag [#allocation6], 1
    %3492 = vsyncpa %s3491, 1
    %3493 = vsyncpa [#allocation4], 1
    %s3494 = scalar_lea.sflag [#allocation4], 1
    %3495 = vsyncpa %s3494, 1

</llo_original>
